<compile_context>
chip_gen: v5e
topology: v5e:2x2
jax: 0.10.0
libtpu: 0.0.40
codegen_flags: <defaults>
</compile_context>

<pallas_src>
import functools

import numpy as np
import jax
import jax.numpy as jnp
from jax.experimental import pallas as pl
from jax.experimental.pallas import tpu as pltpu

# 3x3 tap offsets, row-major: t = (dy+1)*3 + (dx+1) = ky*3 + kx.
_TAPS = tuple((dy, dx) for dy in (-1, 0, 1) for dx in (-1, 0, 1))


# ---------------------------------------------------------------------------
# Fused kernel: whole forward pass, whole batch, one invocation.
# ---------------------------------------------------------------------------
def _fused_unet_kernel(x_ref, w_ref, m_ref, pool_ref, ups_ref, o_ref, taps_ref,
                       *, c_mid, c_out, img_w, lanes_full, lanes_half, col):
    f32 = jnp.float32

    def wslice(name, rows=None):
        lo, hi = col[name]
        if rows is None:
            return w_ref[:, lo:hi]
        return w_ref[0:rows, lo:hi]

    wcp, bcp = wslice("wcp"), wslice("bcp")
    wenc, benc = wslice("wenc"), wslice("benc")
    wbot, bbot = wslice("wbot"), wslice("bbot")
    whead = wslice("whead", rows=c_out)           # (c_out, 2*c_mid)
    bout = wslice("bout", rows=c_out)             # (c_out, 1)
    wup, wskip = whead[:, :c_mid], whead[:, c_mid:]

    def conv3x3_relu(a, w_flat, b, mask_row0, row_w, lanes):
        # a: (c_mid, lanes) row-major, batch packed along lanes.
        # Write the 9 rolled+masked tap views into VMEM scratch, then one
        # (c_mid, 9*c_mid) @ (9*c_mid, lanes) MXU contraction (K = 72).
        c = a.shape[0]
        for t, (dy, dx) in enumerate(_TAPS):
            d = dy * row_w + dx
            s = a if d == 0 else pltpu.roll(a, shift=(-d) % lanes, axis=1)
            s = s * m_ref[mask_row0 + t:mask_row0 + t + 1, 0:lanes]
            taps_ref[t * c:(t + 1) * c, 0:lanes] = s
        acc = jnp.dot(w_flat, taps_ref[:, 0:lanes], preferred_element_type=f32)
        return jnp.maximum(acc + b, 0.0)

    x = x_ref[...]                                                 # (cin, L1)

    # U-Net input conv: 1x1 channel mix + ReLU.
    cp = jnp.maximum(jnp.dot(wcp, x, preferred_element_type=f32) + bcp, 0.0)

    # Encoder 3x3 conv + ReLU (full resolution, batch-packed lanes).
    enc = conv3x3_relu(cp, wenc, benc, 0, img_w, lanes_full)

    # 2x2 / stride-2 max-pool: lane-roll pairwise maxima + constant
    # compaction matmul (only even (y, x) positions are selected, so the
    # lane-wrap across image boundaries never reaches a selected lane).
    hmax = jnp.maximum(enc, pltpu.roll(enc, shift=lanes_full - 1, axis=1))
    vmax = jnp.maximum(hmax, pltpu.roll(hmax, shift=lanes_full - img_w, axis=1))
    pooled = jnp.dot(vmax, pool_ref[...], preferred_element_type=f32)   # (c_mid, L2)

    # Bottleneck 3x3 conv + ReLU at half resolution.
    bott = conv3x3_relu(pooled, wbot, bbot, 9, img_w // 2, lanes_half)

    # Head 1x1 conv over concat([upsample2x(bott), enc]); upsample + concat
    # are folded into two matmuls and never materialized.
    up_head = jnp.dot(jnp.dot(wup, bott, preferred_element_type=f32),
                      ups_ref[...], preferred_element_type=f32)
    skip_head = jnp.dot(wskip, enc, preferred_element_type=f32)
    o_ref[...] = (up_head + skip_head + bout).astype(o_ref.dtype)


# ---------------------------------------------------------------------------
# Constant structure matrices / masks (host-built, baked at trace time)
# ---------------------------------------------------------------------------
def _mask_slab(h, w, n, lanes_full, lanes_half):
    """(18, lanes_full): rows 0:9 full-res boundary masks, 9:18 half-res."""
    def masks(hh, ww, lanes):
        m = np.zeros((9, lanes), np.float32)
        for t, (dy, dx) in enumerate(_TAPS):
            for b in range(n):
                base = b * hh * ww
                for y in range(hh):
                    for xx in range(ww):
                        if 0 <= y + dy < hh and 0 <= xx + dx < ww:
                            m[t, base + y * ww + xx] = 1.0
        return m

    menc = masks(h, w, lanes_full)
    mbot = np.zeros((9, lanes_full), np.float32)
    mbot[:, :lanes_half] = masks(h // 2, w // 2, lanes_half)
    return np.concatenate([menc, mbot], axis=0)


def _pool_matrix(h, w, n, lanes_full, lanes_half):
    """(lanes_full, lanes_half) block-diag per image: picks even (y, x)."""
    h2, w2 = h // 2, w // 2
    m = np.zeros((lanes_full, lanes_half), np.float32)
    for b in range(n):
        for py in range(h2):
            for px in range(w2):
                m[b * h * w + (2 * py) * w + 2 * px,
                  b * h2 * w2 + py * w2 + px] = 1.0
    return m


def _upsample_matrix(h, w, n, lanes_half, lanes_full):
    """(lanes_half, lanes_full) block-diag per image: nearest 2x duplicate."""
    h2, w2 = h // 2, w // 2
    m = np.zeros((lanes_half, lanes_full), np.float32)
    for b in range(n):
        for y in range(h):
            for x in range(w):
                m[b * h2 * w2 + (y // 2) * w2 + (x // 2),
                  b * h * w + y * w + x] = 1.0
    return m


def _pack_weight_slab(params, cin, c_mid, c_out):
    """Pack all weights + biases into one (c_mid, >=128) lane-dense slab."""
    def taps_flat(wconv):
        # (Cout, Cin, 3, 3) -> (Cout, 9*Cin), column index = t*Cin + ci with
        # t = ky*3 + kx, matching the row order of the tap scratch.
        co, ci, kh, kw = wconv.shape
        return wconv.transpose(0, 2, 3, 1).reshape(co, kh * kw * ci)

    def pad_rows(a):
        r = a.shape[0]
        if r == c_mid:
            return a.astype(jnp.float32)
        pad = jnp.zeros((c_mid - r, a.shape[1]), jnp.float32)
        return jnp.concatenate([a.astype(jnp.float32), pad], axis=0)

    pieces = [
        ("wcp", params["cp_w"].reshape(c_mid, cin)),
        ("bcp", params["cp_b"].reshape(c_mid, 1)),
        ("wenc", taps_flat(params["enc_w"])),
        ("benc", params["enc_b"].reshape(c_mid, 1)),
        ("wbot", taps_flat(params["bott_w"])),
        ("bbot", params["bott_b"].reshape(c_mid, 1)),
        ("whead", params["out_w"].reshape(c_out, 2 * c_mid)),
        ("bout", params["out_b"].reshape(c_out, 1)),
    ]
    cols, mats, off = {}, [], 0
    for name, mat in pieces:
        cols[name] = (off, off + mat.shape[1])
        mats.append(pad_rows(mat))
        off += mat.shape[1]
    width = max(128, -(-off // 128) * 128)
    if off < width:
        mats.append(jnp.zeros((c_mid, width - off), jnp.float32))
    return jnp.concatenate(mats, axis=1), cols


# ---------------------------------------------------------------------------
# Wrapper: forward(x) = unet_model(x)
# ---------------------------------------------------------------------------
def my_ensemble_forward(params, x):
    n, cin, h, w = x.shape
    assert h % 2 == 0 and w % 2 == 0, (h, w)
    hw, hw2 = h * w, (h // 2) * (w // 2)
    lanes_full = max(128, -(-(n * hw) // 128) * 128)     # lane-dense, /128
    lanes_half = max(128, -(-(n * hw2) // 128) * 128)

    c_mid = params["enc_w"].shape[0]
    c_out = params["out_w"].shape[0]

    wslab, col = _pack_weight_slab(params, cin, c_mid, c_out)
    mslab = jnp.asarray(_mask_slab(h, w, n, lanes_full, lanes_half))
    pool_sel = jnp.asarray(_pool_matrix(h, w, n, lanes_full, lanes_half))
    ups_sel = jnp.asarray(_upsample_matrix(h, w, n, lanes_half, lanes_full))

    # Batch packed into the lane axis: xf[c, b*hw + y*w + x] = x[b, c, y, x].
    xf = x.transpose(1, 0, 2, 3).reshape(cin, n * hw)
    if lanes_full > n * hw:
        xf = jnp.pad(xf, ((0, 0), (0, lanes_full - n * hw)))

    kernel = functools.partial(
        _fused_unet_kernel, c_mid=c_mid, c_out=c_out, img_w=w,
        lanes_full=lanes_full, lanes_half=lanes_half, col=col)

    vmem_spec = pl.BlockSpec(memory_space=pltpu.MemorySpace.VMEM)
    out = pl.pallas_call(
        kernel,
        out_shape=jax.ShapeDtypeStruct((c_out, lanes_full), jnp.float32),
        in_specs=[vmem_spec] * 5,
        out_specs=vmem_spec,
        scratch_shapes=[pltpu.VMEM((9 * c_mid, lanes_full), jnp.float32)],
    )(xf, wslab, mslab, pool_sel, ups_sel)

    out = out[:, :n * hw].reshape(c_out, n, h, w).transpose(1, 0, 2, 3)
    return out


# ---------------------------------------------------------------------------
# Deterministic parameter init (synthetic, no checkpoint load)
# ---------------------------------------------------------------------------
def init_params(key, in_ch=4, mid=8, out_ch=4):
    ks = jax.random.split(key, 4)

    def conv_w(k, cout, cin, kh, kw):
        fan_in = cin * kh * kw
        return jax.random.normal(k, (cout, cin, kh, kw), jnp.float32) / jnp.sqrt(
            jnp.float32(fan_in))

    return {
        "cp_w": conv_w(ks[0], mid, in_ch, 1, 1),
        "cp_b": jnp.zeros((mid,), jnp.float32),
        "enc_w": conv_w(ks[1], mid, mid, 3, 3),
        "enc_b": jnp.zeros((mid,), jnp.float32),
        "bott_w": conv_w(ks[2], mid, mid, 3, 3),
        "bott_b": jnp.zeros((mid,), jnp.float32),
        "out_w": conv_w(ks[3], out_ch, 2 * mid, 1, 1),
        "out_b": jnp.zeros((out_ch,), jnp.float32),
    }


# ---------------------------------------------------------------------------
# Pure-JAX (XLA) reference, used only for a correctness check.
# ---------------------------------------------------------------------------
def _reference_forward(params, x):
    def conv(t, wgt, b):
        y = jax.lax.conv_general_dilated(
            t, wgt, window_strides=(1, 1), padding="SAME",
            dimension_numbers=("NCHW", "OIHW", "NCHW"),
            precision=jax.lax.Precision.HIGHEST)
        return y + b.reshape(1, -1, 1, 1)

    relu = lambda t: jnp.maximum(t, 0.0)
    cp = relu(conv(x, params["cp_w"], params["cp_b"]))
    enc = relu(conv(cp, params["enc_w"], params["enc_b"]))
    down = jax.lax.reduce_window(enc, -jnp.inf, jax.lax.max,
                                 (1, 1, 2, 2), (1, 1, 2, 2), "VALID")
    bott = relu(conv(down, params["bott_w"], params["bott_b"]))
    up = jnp.repeat(jnp.repeat(bott, 2, axis=2), 2, axis=3)
    cat = jnp.concatenate([up, enc], axis=1)
    return conv(cat, params["out_w"], params["out_b"])


if __name__ == "__main__":
    key = jax.random.PRNGKey(0)
    k_x, k_p = jax.random.split(key)
    x = jax.random.normal(k_x, (2, 4, 16, 16), jnp.float32)     # NCHW
    params = init_params(k_p, in_ch=4, mid=8, out_ch=4)

    fwd = jax.jit(my_ensemble_forward)
    out = jax.block_until_ready(fwd(params, x))

    assert out.shape == (2, 4, 16, 16), out.shape
    assert out.dtype == jnp.float32
    assert bool(jnp.all(jnp.isfinite(out)))

    ref = _reference_forward(params, x)
    max_err = float(jnp.max(jnp.abs(out - ref)))
    assert max_err < 5e-2, f"max |pallas - reference| = {max_err}"

    print("KERNEL_OK")
</pallas_src>

<mosaic_0001>
module attributes {stable_mosaic.version = 11 : i64} {
  func.func @_fused_unet_kernel(%arg0: memref<4x512xf32, #tpu.memory_space<vmem>>, %arg1: memref<8x256xf32, #tpu.memory_space<vmem>>, %arg2: memref<18x512xf32, #tpu.memory_space<vmem>>, %arg3: memref<512x128xf32, #tpu.memory_space<vmem>>, %arg4: memref<128x512xf32, #tpu.memory_space<vmem>>, %arg5: memref<4x512xf32, #tpu.memory_space<vmem>>, %arg6: memref<72x512xf32, #tpu.memory_space<vmem>>) attributes {dimension_semantics = [], scalar_prefetch = 0 : i64, scratch_operands = 1 : i64, tpu.core_type = #tpu.core_type<tc>} {
    %c0 = arith.constant 0 : index
    %c0_0 = arith.constant 0 : index
    %0 = vector.load %arg1[%c0, %c0_0] : memref<8x256xf32, #tpu.memory_space<vmem>>, vector<8x4xf32>
    %c0_1 = arith.constant 0 : index
    %c4 = arith.constant 4 : index
    %1 = vector.load %arg1[%c0_1, %c4] : memref<8x256xf32, #tpu.memory_space<vmem>>, vector<8x1xf32>
    %c0_2 = arith.constant 0 : index
    %c5 = arith.constant 5 : index
    %2 = vector.load %arg1[%c0_2, %c5] : memref<8x256xf32, #tpu.memory_space<vmem>>, vector<8x72xf32>
    %c0_3 = arith.constant 0 : index
    %c77 = arith.constant 77 : index
    %3 = vector.load %arg1[%c0_3, %c77] : memref<8x256xf32, #tpu.memory_space<vmem>>, vector<8x1xf32>
    %c0_4 = arith.constant 0 : index
    %c78 = arith.constant 78 : index
    %4 = vector.load %arg1[%c0_4, %c78] : memref<8x256xf32, #tpu.memory_space<vmem>>, vector<8x72xf32>
    %c0_5 = arith.constant 0 : index
    %c150 = arith.constant 150 : index
    %5 = vector.load %arg1[%c0_5, %c150] : memref<8x256xf32, #tpu.memory_space<vmem>>, vector<8x1xf32>
    %c0_6 = arith.constant 0 : index
    %c151 = arith.constant 151 : index
    %6 = vector.load %arg1[%c0_6, %c151] : memref<8x256xf32, #tpu.memory_space<vmem>>, vector<4x16xf32>
    %c0_7 = arith.constant 0 : index
    %c167 = arith.constant 167 : index
    %7 = vector.load %arg1[%c0_7, %c167] : memref<8x256xf32, #tpu.memory_space<vmem>>, vector<4x1xf32>
    %8 = vector.extract_strided_slice %6 {offsets = [0, 0], sizes = [4, 8], strides = [1, 1]} : vector<4x16xf32> to vector<4x8xf32>
    %9 = vector.extract_strided_slice %6 {offsets = [0, 8], sizes = [4, 8], strides = [1, 1]} : vector<4x16xf32> to vector<4x8xf32>
    %c0_8 = arith.constant 0 : index
    %c0_9 = arith.constant 0 : index
    %10 = vector.load %arg0[%c0_8, %c0_9] : memref<4x512xf32, #tpu.memory_space<vmem>>, vector<4x512xf32>
    %cst = arith.constant dense<0.000000e+00> : vector<8x512xf32>
    %11 = tpu.matmul %0, %10, %cst {dimension_numbers = #tpu.dot_dimension_numbers<[1], [0], [0], [1], [0, 0, 1, 1], [], []>} : vector<8x4xf32>, vector<4x512xf32>, vector<8x512xf32> -> vector<8x512xf32>
    %12 = vector.broadcast %1 : vector<8x1xf32> to vector<8x512xf32>
    %13 = arith.addf %11, %12 : vector<8x512xf32>
    %cst_10 = arith.constant 0.000000e+00 : f32
    %14 = vector.broadcast %cst_10 : f32 to vector<8x512xf32>
    %15 = arith.maximumf %13, %14 : vector<8x512xf32>
    %c17_i32 = arith.constant 17 : i32
    %16 = tpu.dynamic_rotate %15 by %c17_i32 dim 1 : vector<8x512xf32>, i32 -> vector<8x512xf32>
    %c0_11 = arith.constant 0 : index
    %c0_12 = arith.constant 0 : index
    %17 = vector.load %arg2[%c0_11, %c0_12] : memref<18x512xf32, #tpu.memory_space<vmem>>, vector<1x512xf32>
    %18 = vector.broadcast %17 : vector<1x512xf32> to vector<8x512xf32>
    %19 = arith.mulf %16, %18 : vector<8x512xf32>
    %c0_13 = arith.constant 0 : index
    %c0_14 = arith.constant 0 : index
    %20 = vector.load %arg6[%c0_13, %c0_14] : memref<72x512xf32, #tpu.memory_space<vmem>>, vector<8x512xf32>
    tpu.vector_store %arg6[%c0_13, %c0_14], %19 {strides = array<i32>} : memref<72x512xf32, #tpu.memory_space<vmem>>, vector<8x512xf32>,
    %c16_i32 = arith.constant 16 : i32
    %21 = tpu.dynamic_rotate %15 by %c16_i32 dim 1 : vector<8x512xf32>, i32 -> vector<8x512xf32>
    %c1 = arith.constant 1 : index
    %c0_15 = arith.constant 0 : index
    %22 = vector.load %arg2[%c1, %c0_15] : memref<18x512xf32, #tpu.memory_space<vmem>>, vector<1x512xf32>
    %23 = vector.broadcast %22 : vector<1x512xf32> to vector<8x512xf32>
    %24 = arith.mulf %21, %23 : vector<8x512xf32>
    %c8 = arith.constant 8 : index
    %c0_16 = arith.constant 0 : index
    %25 = vector.load %arg6[%c8, %c0_16] : memref<72x512xf32, #tpu.memory_space<vmem>>, vector<8x512xf32>
    tpu.vector_store %arg6[%c8, %c0_16], %24 {strides = array<i32>} : memref<72x512xf32, #tpu.memory_space<vmem>>, vector<8x512xf32>,
    %c15_i32 = arith.constant 15 : i32
    %26 = tpu.dynamic_rotate %15 by %c15_i32 dim 1 : vector<8x512xf32>, i32 -> vector<8x512xf32>
    %c2 = arith.constant 2 : index
    %c0_17 = arith.constant 0 : index
    %27 = vector.load %arg2[%c2, %c0_17] : memref<18x512xf32, #tpu.memory_space<vmem>>, vector<1x512xf32>
    %28 = vector.broadcast %27 : vector<1x512xf32> to vector<8x512xf32>
    %29 = arith.mulf %26, %28 : vector<8x512xf32>
    %c16 = arith.constant 16 : index
    %c0_18 = arith.constant 0 : index
    %30 = vector.load %arg6[%c16, %c0_18] : memref<72x512xf32, #tpu.memory_space<vmem>>, vector<8x512xf32>
    tpu.vector_store %arg6[%c16, %c0_18], %29 {strides = array<i32>} : memref<72x512xf32, #tpu.memory_space<vmem>>, vector<8x512xf32>,
    %c1_i32 = arith.constant 1 : i32
    %31 = tpu.dynamic_rotate %15 by %c1_i32 dim 1 : vector<8x512xf32>, i32 -> vector<8x512xf32>
    %c3 = arith.constant 3 : index
    %c0_19 = arith.constant 0 : index
    %32 = vector.load %arg2[%c3, %c0_19] : memref<18x512xf32, #tpu.memory_space<vmem>>, vector<1x512xf32>
    %33 = vector.broadcast %32 : vector<1x512xf32> to vector<8x512xf32>
    %34 = arith.mulf %31, %33 : vector<8x512xf32>
    %c24 = arith.constant 24 : index
    %c0_20 = arith.constant 0 : index
    %35 = vector.load %arg6[%c24, %c0_20] : memref<72x512xf32, #tpu.memory_space<vmem>>, vector<8x512xf32>
    tpu.vector_store %arg6[%c24, %c0_20], %34 {strides = array<i32>} : memref<72x512xf32, #tpu.memory_space<vmem>>, vector<8x512xf32>,
    %c4_21 = arith.constant 4 : index
    %c0_22 = arith.constant 0 : index
    %36 = vector.load %arg2[%c4_21, %c0_22] : memref<18x512xf32, #tpu.memory_space<vmem>>, vector<1x512xf32>
    %37 = vector.broadcast %36 : vector<1x512xf32> to vector<8x512xf32>
    %38 = arith.mulf %15, %37 : vector<8x512xf32>
    %c32 = arith.constant 32 : index
    %c0_23 = arith.constant 0 : index
    %39 = vector.load %arg6[%c32, %c0_23] : memref<72x512xf32, #tpu.memory_space<vmem>>, vector<8x512xf32>
    tpu.vector_store %arg6[%c32, %c0_23], %38 {strides = array<i32>} : memref<72x512xf32, #tpu.memory_space<vmem>>, vector<8x512xf32>,
    %c511_i32 = arith.constant 511 : i32
    %40 = tpu.dynamic_rotate %15 by %c511_i32 dim 1 : vector<8x512xf32>, i32 -> vector<8x512xf32>
    %c5_24 = arith.constant 5 : index
    %c0_25 = arith.constant 0 : index
    %41 = vector.load %arg2[%c5_24, %c0_25] : memref<18x512xf32, #tpu.memory_space<vmem>>, vector<1x512xf32>
    %42 = vector.broadcast %41 : vector<1x512xf32> to vector<8x512xf32>
    %43 = arith.mulf %40, %42 : vector<8x512xf32>
    %c40 = arith.constant 40 : index
    %c0_26 = arith.constant 0 : index
    %44 = vector.load %arg6[%c40, %c0_26] : memref<72x512xf32, #tpu.memory_space<vmem>>, vector<8x512xf32>
    tpu.vector_store %arg6[%c40, %c0_26], %43 {strides = array<i32>} : memref<72x512xf32, #tpu.memory_space<vmem>>, vector<8x512xf32>,
    %c497_i32 = arith.constant 497 : i32
    %45 = tpu.dynamic_rotate %15 by %c497_i32 dim 1 : vector<8x512xf32>, i32 -> vector<8x512xf32>
    %c6 = arith.constant 6 : index
    %c0_27 = arith.constant 0 : index
    %46 = vector.load %arg2[%c6, %c0_27] : memref<18x512xf32, #tpu.memory_space<vmem>>, vector<1x512xf32>
    %47 = vector.broadcast %46 : vector<1x512xf32> to vector<8x512xf32>
    %48 = arith.mulf %45, %47 : vector<8x512xf32>
    %c48 = arith.constant 48 : index
    %c0_28 = arith.constant 0 : index
    %49 = vector.load %arg6[%c48, %c0_28] : memref<72x512xf32, #tpu.memory_space<vmem>>, vector<8x512xf32>
    tpu.vector_store %arg6[%c48, %c0_28], %48 {strides = array<i32>} : memref<72x512xf32, #tpu.memory_space<vmem>>, vector<8x512xf32>,
    %c496_i32 = arith.constant 496 : i32
    %50 = tpu.dynamic_rotate %15 by %c496_i32 dim 1 : vector<8x512xf32>, i32 -> vector<8x512xf32>
    %c7 = arith.constant 7 : index
    %c0_29 = arith.constant 0 : index
    %51 = vector.load %arg2[%c7, %c0_29] : memref<18x512xf32, #tpu.memory_space<vmem>>, vector<1x512xf32>
    %52 = vector.broadcast %51 : vector<1x512xf32> to vector<8x512xf32>
    %53 = arith.mulf %50, %52 : vector<8x512xf32>
    %c56 = arith.constant 56 : index
    %c0_30 = arith.constant 0 : index
    %54 = vector.load %arg6[%c56, %c0_30] : memref<72x512xf32, #tpu.memory_space<vmem>>, vector<8x512xf32>
    tpu.vector_store %arg6[%c56, %c0_30], %53 {strides = array<i32>} : memref<72x512xf32, #tpu.memory_space<vmem>>, vector<8x512xf32>,
    %c495_i32 = arith.constant 495 : i32
    %55 = tpu.dynamic_rotate %15 by %c495_i32 dim 1 : vector<8x512xf32>, i32 -> vector<8x512xf32>
    %c8_31 = arith.constant 8 : index
    %c0_32 = arith.constant 0 : index
    %56 = vector.load %arg2[%c8_31, %c0_32] : memref<18x512xf32, #tpu.memory_space<vmem>>, vector<1x512xf32>
    %57 = vector.broadcast %56 : vector<1x512xf32> to vector<8x512xf32>
    %58 = arith.mulf %55, %57 : vector<8x512xf32>
    %c64 = arith.constant 64 : index
    %c0_33 = arith.constant 0 : index
    %59 = vector.load %arg6[%c64, %c0_33] : memref<72x512xf32, #tpu.memory_space<vmem>>, vector<8x512xf32>
    tpu.vector_store %arg6[%c64, %c0_33], %58 {strides = array<i32>} : memref<72x512xf32, #tpu.memory_space<vmem>>, vector<8x512xf32>,
    %c0_34 = arith.constant 0 : index
    %c0_35 = arith.constant 0 : index
    %60 = vector.load %arg6[%c0_34, %c0_35] : memref<72x512xf32, #tpu.memory_space<vmem>>, vector<72x512xf32>
    %cst_36 = arith.constant dense<0.000000e+00> : vector<8x512xf32>
    %61 = tpu.matmul %2, %60, %cst_36 {dimension_numbers = #tpu.dot_dimension_numbers<[1], [0], [0], [1], [0, 0, 1, 1], [], []>} : vector<8x72xf32>, vector<72x512xf32>, vector<8x512xf32> -> vector<8x512xf32>
    %62 = vector.broadcast %3 : vector<8x1xf32> to vector<8x512xf32>
    %63 = arith.addf %61, %62 : vector<8x512xf32>
    %cst_37 = arith.constant 0.000000e+00 : f32
    %64 = vector.broadcast %cst_37 : f32 to vector<8x512xf32>
    %65 = arith.maximumf %63, %64 : vector<8x512xf32>
    %c511_i32_38 = arith.constant 511 : i32
    %66 = tpu.dynamic_rotate %65 by %c511_i32_38 dim 1 : vector<8x512xf32>, i32 -> vector<8x512xf32>
    %67 = arith.maximumf %65, %66 : vector<8x512xf32>
    %c496_i32_39 = arith.constant 496 : i32
    %68 = tpu.dynamic_rotate %67 by %c496_i32_39 dim 1 : vector<8x512xf32>, i32 -> vector<8x512xf32>
    %69 = arith.maximumf %67, %68 : vector<8x512xf32>
    %c0_40 = arith.constant 0 : index
    %c0_41 = arith.constant 0 : index
    %70 = vector.load %arg3[%c0_40, %c0_41] : memref<512x128xf32, #tpu.memory_space<vmem>>, vector<512x128xf32>
    %cst_42 = arith.constant dense<0.000000e+00> : vector<8x128xf32>
    %71 = tpu.matmul %69, %70, %cst_42 {dimension_numbers = #tpu.dot_dimension_numbers<[1], [0], [0], [1], [0, 0, 1, 1], [], []>} : vector<8x512xf32>, vector<512x128xf32>, vector<8x128xf32> -> vector<8x128xf32>
    %c9_i32 = arith.constant 9 : i32
    %72 = tpu.dynamic_rotate %71 by %c9_i32 dim 1 : vector<8x128xf32>, i32 -> vector<8x128xf32>
    %c9 = arith.constant 9 : index
    %c0_43 = arith.constant 0 : index
    %73 = vector.load %arg2[%c9, %c0_43] : memref<18x512xf32, #tpu.memory_space<vmem>>, vector<1x128xf32>
    %74 = vector.broadcast %73 : vector<1x128xf32> to vector<8x128xf32>
    %75 = arith.mulf %72, %74 : vector<8x128xf32>
    %c0_44 = arith.constant 0 : index
    %c0_45 = arith.constant 0 : index
    %76 = vector.load %arg6[%c0_44, %c0_45] : memref<72x512xf32, #tpu.memory_space<vmem>>, vector<8x128xf32>
    tpu.vector_store %arg6[%c0_44, %c0_45], %75 {strides = array<i32>} : memref<72x512xf32, #tpu.memory_space<vmem>>, vector<8x128xf32>,
    %c8_i32 = arith.constant 8 : i32
    %77 = tpu.dynamic_rotate %71 by %c8_i32 dim 1 : vector<8x128xf32>, i32 -> vector<8x128xf32>
    %c10 = arith.constant 10 : index
    %c0_46 = arith.constant 0 : index
    %78 = vector.load %arg2[%c10, %c0_46] : memref<18x512xf32, #tpu.memory_space<vmem>>, vector<1x128xf32>
    %79 = vector.broadcast %78 : vector<1x128xf32> to vector<8x128xf32>
    %80 = arith.mulf %77, %79 : vector<8x128xf32>
    %c8_47 = arith.constant 8 : index
    %c0_48 = arith.constant 0 : index
    %81 = vector.load %arg6[%c8_47, %c0_48] : memref<72x512xf32, #tpu.memory_space<vmem>>, vector<8x128xf32>
    tpu.vector_store %arg6[%c8_47, %c0_48], %80 {strides = array<i32>} : memref<72x512xf32, #tpu.memory_space<vmem>>, vector<8x128xf32>,
    %c7_i32 = arith.constant 7 : i32
    %82 = tpu.dynamic_rotate %71 by %c7_i32 dim 1 : vector<8x128xf32>, i32 -> vector<8x128xf32>
    %c11 = arith.constant 11 : index
    %c0_49 = arith.constant 0 : index
    %83 = vector.load %arg2[%c11, %c0_49] : memref<18x512xf32, #tpu.memory_space<vmem>>, vector<1x128xf32>
    %84 = vector.broadcast %83 : vector<1x128xf32> to vector<8x128xf32>
    %85 = arith.mulf %82, %84 : vector<8x128xf32>
    %c16_50 = arith.constant 16 : index
    %c0_51 = arith.constant 0 : index
    %86 = vector.load %arg6[%c16_50, %c0_51] : memref<72x512xf32, #tpu.memory_space<vmem>>, vector<8x128xf32>
    tpu.vector_store %arg6[%c16_50, %c0_51], %85 {strides = array<i32>} : memref<72x512xf32, #tpu.memory_space<vmem>>, vector<8x128xf32>,
    %c1_i32_52 = arith.constant 1 : i32
    %87 = tpu.dynamic_rotate %71 by %c1_i32_52 dim 1 : vector<8x128xf32>, i32 -> vector<8x128xf32>
    %c12 = arith.constant 12 : index
    %c0_53 = arith.constant 0 : index
    %88 = vector.load %arg2[%c12, %c0_53] : memref<18x512xf32, #tpu.memory_space<vmem>>, vector<1x128xf32>
    %89 = vector.broadcast %88 : vector<1x128xf32> to vector<8x128xf32>
    %90 = arith.mulf %87, %89 : vector<8x128xf32>
    %c24_54 = arith.constant 24 : index
    %c0_55 = arith.constant 0 : index
    %91 = vector.load %arg6[%c24_54, %c0_55] : memref<72x512xf32, #tpu.memory_space<vmem>>, vector<8x128xf32>
    tpu.vector_store %arg6[%c24_54, %c0_55], %90 {strides = array<i32>} : memref<72x512xf32, #tpu.memory_space<vmem>>, vector<8x128xf32>,
    %c13 = arith.constant 13 : index
    %c0_56 = arith.constant 0 : index
    %92 = vector.load %arg2[%c13, %c0_56] : memref<18x512xf32, #tpu.memory_space<vmem>>, vector<1x128xf32>
    %93 = vector.broadcast %92 : vector<1x128xf32> to vector<8x128xf32>
    %94 = arith.mulf %71, %93 : vector<8x128xf32>
    %c32_57 = arith.constant 32 : index
    %c0_58 = arith.constant 0 : index
    %95 = vector.load %arg6[%c32_57, %c0_58] : memref<72x512xf32, #tpu.memory_space<vmem>>, vector<8x128xf32>
    tpu.vector_store %arg6[%c32_57, %c0_58], %94 {strides = array<i32>} : memref<72x512xf32, #tpu.memory_space<vmem>>, vector<8x128xf32>,
    %c127_i32 = arith.constant 127 : i32
    %96 = tpu.dynamic_rotate %71 by %c127_i32 dim 1 : vector<8x128xf32>, i32 -> vector<8x128xf32>
    %c14 = arith.constant 14 : index
    %c0_59 = arith.constant 0 : index
    %97 = vector.load %arg2[%c14, %c0_59] : memref<18x512xf32, #tpu.memory_space<vmem>>, vector<1x128xf32>
    %98 = vector.broadcast %97 : vector<1x128xf32> to vector<8x128xf32>
    %99 = arith.mulf %96, %98 : vector<8x128xf32>
    %c40_60 = arith.constant 40 : index
    %c0_61 = arith.constant 0 : index
    %100 = vector.load %arg6[%c40_60, %c0_61] : memref<72x512xf32, #tpu.memory_space<vmem>>, vector<8x128xf32>
    tpu.vector_store %arg6[%c40_60, %c0_61], %99 {strides = array<i32>} : memref<72x512xf32, #tpu.memory_space<vmem>>, vector<8x128xf32>,
    %c121_i32 = arith.constant 121 : i32
    %101 = tpu.dynamic_rotate %71 by %c121_i32 dim 1 : vector<8x128xf32>, i32 -> vector<8x128xf32>
    %c15 = arith.constant 15 : index
    %c0_62 = arith.constant 0 : index
    %102 = vector.load %arg2[%c15, %c0_62] : memref<18x512xf32, #tpu.memory_space<vmem>>, vector<1x128xf32>
    %103 = vector.broadcast %102 : vector<1x128xf32> to vector<8x128xf32>
    %104 = arith.mulf %101, %103 : vector<8x128xf32>
    %c48_63 = arith.constant 48 : index
    %c0_64 = arith.constant 0 : index
    %105 = vector.load %arg6[%c48_63, %c0_64] : memref<72x512xf32, #tpu.memory_space<vmem>>, vector<8x128xf32>
    tpu.vector_store %arg6[%c48_63, %c0_64], %104 {strides = array<i32>} : memref<72x512xf32, #tpu.memory_space<vmem>>, vector<8x128xf32>,
    %c120_i32 = arith.constant 120 : i32
    %106 = tpu.dynamic_rotate %71 by %c120_i32 dim 1 : vector<8x128xf32>, i32 -> vector<8x128xf32>
    %c16_65 = arith.constant 16 : index
    %c0_66 = arith.constant 0 : index
    %107 = vector.load %arg2[%c16_65, %c0_66] : memref<18x512xf32, #tpu.memory_space<vmem>>, vector<1x128xf32>
    %108 = vector.broadcast %107 : vector<1x128xf32> to vector<8x128xf32>
    %109 = arith.mulf %106, %108 : vector<8x128xf32>
    %c56_67 = arith.constant 56 : index
    %c0_68 = arith.constant 0 : index
    %110 = vector.load %arg6[%c56_67, %c0_68] : memref<72x512xf32, #tpu.memory_space<vmem>>, vector<8x128xf32>
    tpu.vector_store %arg6[%c56_67, %c0_68], %109 {strides = array<i32>} : memref<72x512xf32, #tpu.memory_space<vmem>>, vector<8x128xf32>,
    %c119_i32 = arith.constant 119 : i32
    %111 = tpu.dynamic_rotate %71 by %c119_i32 dim 1 : vector<8x128xf32>, i32 -> vector<8x128xf32>
    %c17 = arith.constant 17 : index
    %c0_69 = arith.constant 0 : index
    %112 = vector.load %arg2[%c17, %c0_69] : memref<18x512xf32, #tpu.memory_space<vmem>>, vector<1x128xf32>
    %113 = vector.broadcast %112 : vector<1x128xf32> to vector<8x128xf32>
    %114 = arith.mulf %111, %113 : vector<8x128xf32>
    %c64_70 = arith.constant 64 : index
    %c0_71 = arith.constant 0 : index
    %115 = vector.load %arg6[%c64_70, %c0_71] : memref<72x512xf32, #tpu.memory_space<vmem>>, vector<8x128xf32>
    tpu.vector_store %arg6[%c64_70, %c0_71], %114 {strides = array<i32>} : memref<72x512xf32, #tpu.memory_space<vmem>>, vector<8x128xf32>,
    %c0_72 = arith.constant 0 : index
    %c0_73 = arith.constant 0 : index
    %116 = vector.load %arg6[%c0_72, %c0_73] : memref<72x512xf32, #tpu.memory_space<vmem>>, vector<72x128xf32>
    %cst_74 = arith.constant dense<0.000000e+00> : vector<8x128xf32>
    %117 = tpu.matmul %4, %116, %cst_74 {dimension_numbers = #tpu.dot_dimension_numbers<[1], [0], [0], [1], [0, 0, 1, 1], [], []>} : vector<8x72xf32>, vector<72x128xf32>, vector<8x128xf32> -> vector<8x128xf32>
    %118 = vector.broadcast %5 : vector<8x1xf32> to vector<8x128xf32>
    %119 = arith.addf %117, %118 : vector<8x128xf32>
    %cst_75 = arith.constant 0.000000e+00 : f32
    %120 = vector.broadcast %cst_75 : f32 to vector<8x128xf32>
    %121 = arith.maximumf %119, %120 : vector<8x128xf32>
    %cst_76 = arith.constant dense<0.000000e+00> : vector<4x128xf32>
    %122 = tpu.matmul %8, %121, %cst_76 {dimension_numbers = #tpu.dot_dimension_numbers<[1], [0], [0], [1], [0, 0, 1, 1], [], []>} : vector<4x8xf32>, vector<8x128xf32>, vector<4x128xf32> -> vector<4x128xf32>
    %c0_77 = arith.constant 0 : index
    %c0_78 = arith.constant 0 : index
    %123 = vector.load %arg4[%c0_77, %c0_78] : memref<128x512xf32, #tpu.memory_space<vmem>>, vector<128x512xf32>
    %cst_79 = arith.constant dense<0.000000e+00> : vector<4x512xf32>
    %124 = tpu.matmul %122, %123, %cst_79 {dimension_numbers = #tpu.dot_dimension_numbers<[1], [0], [0], [1], [0, 0, 1, 1], [], []>} : vector<4x128xf32>, vector<128x512xf32>, vector<4x512xf32> -> vector<4x512xf32>
    %cst_80 = arith.constant dense<0.000000e+00> : vector<4x512xf32>
    %125 = tpu.matmul %9, %65, %cst_80 {dimension_numbers = #tpu.dot_dimension_numbers<[1], [0], [0], [1], [0, 0, 1, 1], [], []>} : vector<4x8xf32>, vector<8x512xf32>, vector<4x512xf32> -> vector<4x512xf32>
    %126 = arith.addf %124, %125 : vector<4x512xf32>
    %127 = vector.broadcast %7 : vector<4x1xf32> to vector<4x512xf32>
    %128 = arith.addf %126, %127 : vector<4x512xf32>
    %c0_81 = arith.constant 0 : index
    %c0_82 = arith.constant 0 : index
    %129 = vector.load %arg5[%c0_81, %c0_82] : memref<4x512xf32, #tpu.memory_space<vmem>>, vector<4x512xf32>
    tpu.vector_store %arg5[%c0_81, %c0_82], %128 {strides = array<i32>} : memref<4x512xf32, #tpu.memory_space<vmem>>, vector<4x512xf32>,
    return
  }
}

</mosaic_0001>

<llo_original>
// kernel: my_ensemble_forward.1
$region0: #{my_ensemble_forward.1}
  #allocation0 [shape = 'u32[]', space=smem, size = 0x4, offset = 0x4, fixed_abs, tag = 'smem constant byte address 0x4 - core index']
  #allocation1 [shape = 'u32[72,128]{1,0:T(1,128)}', space=vmem, size = 0x9000, scoped, tag = 'internal scratch']
  #allocation2 [shape = 'f32[72,512]{1,0:T(8,128)}', space=vmem, size = 0x24000, scoped, tag = 'scratch operand']
  %s0 = inlined_call_operand.vmem [shape: f32[4,512], index: 0, kind: input, shape index: {}]
  %s1 = inlined_call_operand.vmem [shape: f32[8,256], index: 1, kind: input, shape index: {}]
  %s2 = inlined_call_operand.vmem [shape: f32[18,512], index: 2, kind: input, shape index: {}]
  %s3 = inlined_call_operand.hbm [shape: f32[512,128], index: 3, kind: input, shape index: {}]
  %s4 = inlined_call_operand.hbm [shape: f32[128,512], index: 4, kind: input, shape index: {}]
  %s5 = inlined_call_operand.vmem [shape: f32[4,512], index: 5, kind: output, shape index: {}]
  %s6 = sld [smem:[#allocation0]]
  $region38: #{my_ensemble_forward.1} parent=0
    _
  %s8 = ssub.s32 1, %s6
  %s9 = scalar_select 0, %s8, %s6
  $region1: #{my_ensemble_forward.1} parent=0
    #allocation3 [shape = 'u8[262144]{0}', space=vmem, size = 0x40000, scoped, tag = 'input window, operand 3, single buffered']
    #allocation4 [shape = 's32[1]{0}', space=sflag, size = 0x4, scoped, tag = 'scoped memory for my_ensemble_forward.1']
    #allocation5 [shape = 'u8[262144]{0}', space=vmem, size = 0x40000, scoped, tag = 'input window, operand 4, single buffered']
    #allocation6 [shape = 's32[1]{0}', space=sflag, size = 0x4, scoped, tag = 'scoped memory for my_ensemble_forward.1']
    %10 = vsyncpa [#allocation4], 0
    %11 = vsyncpa [#allocation6], 0
    // Predicated region
    $region2: #{my_ensemble_forward.1} parent=1 // pred_check
      _
    $region3: #{my_ensemble_forward.1} parent=1 // pred_check_branch
      %13 = sbr.rel (0) target = $region5
    $region4: #{my_ensemble_forward.1} parent=1 // pred_region
      _
    $region5: #{my_ensemble_forward.1} parent=1 // pred_fallthru
      _
    // Predicated region
    $region6: #{my_ensemble_forward.1} parent=1 // pred_check
      _
    $region7: #{my_ensemble_forward.1} parent=1 // pred_check_branch
      %15 = sbr.rel (0) target = $region9
    $region8: #{my_ensemble_forward.1} parent=1 // pred_region
      _
    $region9: #{my_ensemble_forward.1} parent=1 // pred_fallthru
      _
    // Predicated region
    $region10: #{my_ensemble_forward.1} parent=1 // pred_check
      _
    $region11: #{my_ensemble_forward.1} parent=1 // pred_check_branch
      %17 = sbr.rel (0) target = $region13
    $region12: #{my_ensemble_forward.1} parent=1 // pred_region
      _
    $region13: #{my_ensemble_forward.1} parent=1 // pred_fallthru
      _
    // Predicated region
    $region14: #{my_ensemble_forward.1} parent=1 // pred_check
      _
    $region15: #{my_ensemble_forward.1} parent=1 // pred_check_branch
      %19 = sbr.rel (0) target = $region17
    $region16: #{my_ensemble_forward.1} parent=1 // pred_region
      %21 = vsyncadd [#allocation4], 0
      %s22 = sshll.u32 %s3, 4
      %s23 = int_to_ptr.hbm [resolvable:$true] %s22
      %s24 = sshll.u32 [#allocation3], 4
      %s25 = int_to_ptr.vmem [resolvable:$true] %s24
      %30 = dma.hbm_to_vmem [thread:$0]  %s23, 8192, %s25, [#allocation4], 128, 128, 8
    $region17: #{my_ensemble_forward.1} parent=1 // pred_fallthru
      _
    // Predicated region
    $region18: #{my_ensemble_forward.1} parent=1 // pred_check
      _
    $region19: #{my_ensemble_forward.1} parent=1 // pred_check_branch
      %32 = sbr.rel (0) target = $region21
    $region20: #{my_ensemble_forward.1} parent=1 // pred_region
      %34 = vsyncadd [#allocation6], 0
      %s35 = sshll.u32 %s4, 4
      %s36 = int_to_ptr.hbm [resolvable:$true] %s35
      %s37 = sshll.u32 [#allocation5], 4
      %s38 = int_to_ptr.vmem [resolvable:$true] %s37
      %43 = dma.hbm_to_vmem [thread:$0]  %s36, 8192, %s38, [#allocation6], 512, 512, 32
    $region21: #{my_ensemble_forward.1} parent=1 // pred_fallthru
      _
    // Predicated region
    $region22: #{my_ensemble_forward.1} parent=1 // pred_check
      _
    $region23: #{my_ensemble_forward.1} parent=1 // pred_check_branch
      %45 = sbr.rel (0) target = $region25
    $region24: #{my_ensemble_forward.1} parent=1 // pred_region
      %47 = dma.done [#allocation4], 8192
    $region25: #{my_ensemble_forward.1} parent=1 // pred_fallthru
      _
    // Predicated region
    $region26: #{my_ensemble_forward.1} parent=1 // pred_check
      _
    $region27: #{my_ensemble_forward.1} parent=1 // pred_check_branch
      %49 = sbr.rel (0) target = $region29
    $region28: #{my_ensemble_forward.1} parent=1 // pred_region
      %51 = dma.done [#allocation6], 8192
    $region29: #{my_ensemble_forward.1} parent=1 // pred_fallthru
      _
    %v52 = vld [vmem:[%s1] sm:$0xff]
    %v53 = vld [vmem:[%s1] sm:$0xff]
    %v54 = vld [vmem:[%s1 + $0x8] sm:$0xff]
    %v55 = vld [vmem:[%s1 + $0x8] sm:$0xf]
    %v56 = vld [vmem:[%s0] sm:$0xff]
    %v57 = vld [vmem:[%s0 + $0x8] sm:$0xff]
    %59 = vset.pattern.permute.xlu0 4
    %60 = vperm.xlu0 %59, %v52
    %v61 = vpop.permute.xlu0 %60
    %65 = vst [vmem:[#allocation1] ss:$2 sm:$0xff] %v56
    %s66 = scalar_lea.vmem [#allocation1], 16
    %67 = vst [vmem:[%s66] ss:$2 sm:$0xff] %v57
    %v68 = vld.sshfl [vmem:[#allocation1] sm:$0xff pattern:$0x75316420]
    %v69 = vld.sshfl [vmem:[#allocation1 + $0x8] sm:$0xff pattern:$0x75316420]
    %v70 = vld.sshfl [vmem:[#allocation1 + $0x10] sm:$0xff pattern:$0x75316420]
    %v71 = vld.sshfl [vmem:[#allocation1 + $0x18] sm:$0xff pattern:$0x75316420]
    %vm72 = vcmask 31744
    %v73 = vsel %vm72, %v52, 0
    %vm75 = vcmask 1043456
    %v76 = vsel %vm75, %v68, 0
    %v78 = vsel %vm75, %v69, 0
    %v80 = vsel %vm75, %v70, 0
    %v82 = vsel %vm75, %v71, 0
    %84 = vmatpush.msra.mxu0 0.0
    %85 = vmatpush.msra.mxu0 0.0
    %86 = vmatpush.msra.mxu0 0.0
    %87 = vmatpush.msra.mxu0 0.0
    %88 = vmatpush.msra.mxu0 0.0
    %89 = vmatpush.msra.mxu0 0.0
    %90 = vmatpush.msra.mxu0 0.0
    %91 = vmatpush.msra.mxu0 0.0
    %92 = vmatpush.msra.mxu0 0.0
    %93 = vmatpush.msra.mxu0 0.0
    %94 = vmatpush.msra.mxu0 0.0
    %95 = vmatpush.msra.mxu0 0.0
    %96 = vmatpush.msra.mxu0 0.0
    %97 = vmatpush.msra.mxu0 0.0
    %98 = vmatpush.msra.mxu0 0.0
    %99 = vmatpush.msra.mxu0 %v76
    %100 = vmatmul.f32.gmra.mxu0 %v73
    %v101 = vpop.f32.mrf.mxu0
    %v102 = vadd.f32 %v61, %v101
    %103 = vdwg.mxu0
    %104 = vmatpush.msra.mxu0 0.0
    %105 = vmatpush.msra.mxu0 0.0
    %106 = vmatpush.msra.mxu0 0.0
    %107 = vmatpush.msra.mxu0 0.0
    %108 = vmatpush.msra.mxu0 0.0
    %109 = vmatpush.msra.mxu0 0.0
    %110 = vmatpush.msra.mxu0 0.0
    %111 = vmatpush.msra.mxu0 0.0
    %112 = vmatpush.msra.mxu0 0.0
    %113 = vmatpush.msra.mxu0 0.0
    %114 = vmatpush.msra.mxu0 0.0
    %115 = vmatpush.msra.mxu0 0.0
    %116 = vmatpush.msra.mxu0 0.0
    %117 = vmatpush.msra.mxu0 0.0
    %118 = vmatpush.msra.mxu0 0.0
    %119 = vmatpush.msra.mxu0 %v78
    %120 = vmatmul.f32.gmra.mxu0 %v73
    %v121 = vpop.f32.mrf.mxu0
    %v122 = vadd.f32 %v61, %v121
    %123 = vdwg.mxu0
    %124 = vmatpush.msra.mxu0 0.0
    %125 = vmatpush.msra.mxu0 0.0
    %126 = vmatpush.msra.mxu0 0.0
    %127 = vmatpush.msra.mxu0 0.0
    %128 = vmatpush.msra.mxu0 0.0
    %129 = vmatpush.msra.mxu0 0.0
    %130 = vmatpush.msra.mxu0 0.0
    %131 = vmatpush.msra.mxu0 0.0
    %132 = vmatpush.msra.mxu0 0.0
    %133 = vmatpush.msra.mxu0 0.0
    %134 = vmatpush.msra.mxu0 0.0
    %135 = vmatpush.msra.mxu0 0.0
    %136 = vmatpush.msra.mxu0 0.0
    %137 = vmatpush.msra.mxu0 0.0
    %138 = vmatpush.msra.mxu0 0.0
    %139 = vmatpush.msra.mxu0 %v80
    %140 = vmatmul.f32.gmra.mxu0 %v73
    %v141 = vpop.f32.mrf.mxu0
    %v142 = vadd.f32 %v61, %v141
    %143 = vdwg.mxu0
    %144 = vmatpush.msra.mxu0 0.0
    %145 = vmatpush.msra.mxu0 0.0
    %146 = vmatpush.msra.mxu0 0.0
    %147 = vmatpush.msra.mxu0 0.0
    %148 = vmatpush.msra.mxu0 0.0
    %149 = vmatpush.msra.mxu0 0.0
    %150 = vmatpush.msra.mxu0 0.0
    %151 = vmatpush.msra.mxu0 0.0
    %152 = vmatpush.msra.mxu0 0.0
    %153 = vmatpush.msra.mxu0 0.0
    %154 = vmatpush.msra.mxu0 0.0
    %155 = vmatpush.msra.mxu0 0.0
    %156 = vmatpush.msra.mxu0 0.0
    %157 = vmatpush.msra.mxu0 0.0
    %158 = vmatpush.msra.mxu0 0.0
    %159 = vmatpush.msra.mxu0 %v82
    %160 = vmatmul.f32.gmra.mxu0 %v73
    %v161 = vpop.f32.mrf.mxu0
    %v162 = vadd.f32 %v61, %v161
    %163 = vdwg.mxu0
    %v164 = vmax.f32 %v102, 0.0
    %v165 = vmax.f32 %v122, 0.0
    %v166 = vmax.f32 %v142, 0.0
    %v167 = vmax.f32 %v162, 0.0
    %168 = vrot.lane.b32.xlu0 %v164, 17
    %v169 = vpop.permute.xlu0 %168
    %170 = vrot.lane.b32.xlu0 %v165, 17
    %v171 = vpop.permute.xlu0 %170
    %172 = vrot.lane.b32.xlu0 %v166, 17
    %v173 = vpop.permute.xlu0 %172
    %174 = vrot.lane.b32.xlu0 %v167, 17
    %v175 = vpop.permute.xlu0 %174
    %v176 = vlaneseq
    %v177 = vand.u32 %v176, 127
    %vm178 = vcmp.lt.s32.totalorder %v177, 17
    %v179 = vsel %vm178, %v173, %v175
    %v180 = vsel %vm178, %v171, %v173
    %v181 = vsel %vm178, %v169, %v171
    %v182 = vsel %vm178, %v175, %v169
    %v183 = vld [vmem:[%s2] ss:$8 sm:$0xf]
    %v185 = vperm.slane %v183, 0
    %v186 = vperm.slane %v183, 1
    %v187 = vperm.slane %v183, 2
    %v188 = vperm.slane %v183, 3
    %v193 = vmul.f32 %v182, %v185
    %v194 = vmul.f32 %v181, %v186
    %v195 = vmul.f32 %v180, %v187
    %v196 = vmul.f32 %v179, %v188
    %197 = vst [vmem:[#allocation2] sm:$0xff] %v193
    %198 = vst [vmem:[#allocation2 + $0x8] sm:$0xff] %v194
    %199 = vst [vmem:[#allocation2 + $0x10] sm:$0xff] %v195
    %200 = vst [vmem:[#allocation2 + $0x18] sm:$0xff] %v196
    %201 = vrot.lane.b32.xlu0 %v164, 16
    %v202 = vpop.permute.xlu0 %201
    %203 = vrot.lane.b32.xlu0 %v165, 16
    %v204 = vpop.permute.xlu0 %203
    %205 = vrot.lane.b32.xlu0 %v166, 16
    %v206 = vpop.permute.xlu0 %205
    %207 = vrot.lane.b32.xlu0 %v167, 16
    %v208 = vpop.permute.xlu0 %207
    %vm209 = vcmp.lt.s32.totalorder %v177, 16
    %v210 = vsel %vm209, %v206, %v208
    %v211 = vsel %vm209, %v204, %v206
    %v212 = vsel %vm209, %v202, %v204
    %v213 = vsel %vm209, %v208, %v202
    %s214 = scalar_lea.vmem %s2, 1
    %v215 = vld [vmem:[%s214] ss:$8 sm:$0xf]
    %v217 = vperm.slane %v215, 0
    %v218 = vperm.slane %v215, 1
    %v219 = vperm.slane %v215, 2
    %v220 = vperm.slane %v215, 3
    %v225 = vmul.f32 %v213, %v217
    %v226 = vmul.f32 %v212, %v218
    %v227 = vmul.f32 %v211, %v219
    %v228 = vmul.f32 %v210, %v220
    %229 = vst [vmem:[#allocation2 + $0x20] sm:$0xff] %v225
    %230 = vst [vmem:[#allocation2 + $0x28] sm:$0xff] %v226
    %231 = vst [vmem:[#allocation2 + $0x30] sm:$0xff] %v227
    %232 = vst [vmem:[#allocation2 + $0x38] sm:$0xff] %v228
    %233 = vrot.lane.b32.xlu0 %v164, 15
    %v234 = vpop.permute.xlu0 %233
    %235 = vrot.lane.b32.xlu0 %v165, 15
    %v236 = vpop.permute.xlu0 %235
    %237 = vrot.lane.b32.xlu0 %v166, 15
    %v238 = vpop.permute.xlu0 %237
    %239 = vrot.lane.b32.xlu0 %v167, 15
    %v240 = vpop.permute.xlu0 %239
    %vm241 = vcmp.lt.s32.totalorder %v177, 15
    %v242 = vsel %vm241, %v238, %v240
    %v243 = vsel %vm241, %v236, %v238
    %v244 = vsel %vm241, %v234, %v236
    %v245 = vsel %vm241, %v240, %v234
    %s246 = scalar_lea.vmem %s2, 2
    %v247 = vld [vmem:[%s246] ss:$8 sm:$0xf]
    %v249 = vperm.slane %v247, 0
    %v250 = vperm.slane %v247, 1
    %v251 = vperm.slane %v247, 2
    %v252 = vperm.slane %v247, 3
    %v257 = vmul.f32 %v245, %v249
    %v258 = vmul.f32 %v244, %v250
    %v259 = vmul.f32 %v243, %v251
    %v260 = vmul.f32 %v242, %v252
    %261 = vst [vmem:[#allocation2 + $0x40] sm:$0xff] %v257
    %262 = vst [vmem:[#allocation2 + $0x48] sm:$0xff] %v258
    %263 = vst [vmem:[#allocation2 + $0x50] sm:$0xff] %v259
    %264 = vst [vmem:[#allocation2 + $0x58] sm:$0xff] %v260
    %265 = vrot.lane.b32.xlu0 %v164, 1
    %v266 = vpop.permute.xlu0 %265
    %267 = vrot.lane.b32.xlu0 %v165, 1
    %v268 = vpop.permute.xlu0 %267
    %269 = vrot.lane.b32.xlu0 %v166, 1
    %v270 = vpop.permute.xlu0 %269
    %271 = vrot.lane.b32.xlu0 %v167, 1
    %v272 = vpop.permute.xlu0 %271
    %vm273 = vcmp.lt.s32.totalorder %v177, 1
    %v274 = vsel %vm273, %v270, %v272
    %v275 = vsel %vm273, %v268, %v270
    %v276 = vsel %vm273, %v266, %v268
    %v277 = vsel %vm273, %v272, %v266
    %s278 = scalar_lea.vmem %s2, 3
    %v279 = vld [vmem:[%s278] ss:$8 sm:$0xf]
    %v281 = vperm.slane %v279, 0
    %v282 = vperm.slane %v279, 1
    %v283 = vperm.slane %v279, 2
    %v284 = vperm.slane %v279, 3
    %v289 = vmul.f32 %v277, %v281
    %v290 = vmul.f32 %v276, %v282
    %v291 = vmul.f32 %v275, %v283
    %v292 = vmul.f32 %v274, %v284
    %293 = vst [vmem:[#allocation2 + $0x60] sm:$0xff] %v289
    %294 = vst [vmem:[#allocation2 + $0x68] sm:$0xff] %v290
    %295 = vst [vmem:[#allocation2 + $0x70] sm:$0xff] %v291
    %296 = vst [vmem:[#allocation2 + $0x78] sm:$0xff] %v292
    %s297 = scalar_lea.vmem %s2, 4
    %v298 = vld [vmem:[%s297] ss:$8 sm:$0xf]
    %v300 = vperm.slane %v298, 0
    %v301 = vperm.slane %v298, 1
    %v302 = vperm.slane %v298, 2
    %v303 = vperm.slane %v298, 3
    %v308 = vmul.f32 %v164, %v300
    %v309 = vmul.f32 %v165, %v301
    %v310 = vmul.f32 %v166, %v302
    %v311 = vmul.f32 %v167, %v303
    %312 = vst [vmem:[#allocation2 + $0x80] sm:$0xff] %v308
    %313 = vst [vmem:[#allocation2 + $0x88] sm:$0xff] %v309
    %314 = vst [vmem:[#allocation2 + $0x90] sm:$0xff] %v310
    %315 = vst [vmem:[#allocation2 + $0x98] sm:$0xff] %v311
    %316 = vrot.lane.b32.xlu0 %v164, 127
    %v317 = vpop.permute.xlu0 %316
    %318 = vrot.lane.b32.xlu0 %v165, 127
    %v319 = vpop.permute.xlu0 %318
    %320 = vrot.lane.b32.xlu0 %v166, 127
    %v321 = vpop.permute.xlu0 %320
    %322 = vrot.lane.b32.xlu0 %v167, 127
    %v323 = vpop.permute.xlu0 %322
    %vm324 = vcmp.lt.s32.totalorder %v177, 127
    %v325 = vsel %vm324, %v321, %v323
    %v326 = vsel %vm324, %v319, %v321
    %v327 = vsel %vm324, %v317, %v319
    %v328 = vsel %vm324, %v323, %v317
    %s329 = scalar_lea.vmem %s2, 5
    %v330 = vld [vmem:[%s329] ss:$8 sm:$0xf]
    %v332 = vperm.slane %v330, 0
    %v333 = vperm.slane %v330, 1
    %v334 = vperm.slane %v330, 2
    %v335 = vperm.slane %v330, 3
    %v340 = vmul.f32 %v327, %v332
    %v341 = vmul.f32 %v326, %v333
    %v342 = vmul.f32 %v325, %v334
    %v343 = vmul.f32 %v328, %v335
    %344 = vst [vmem:[#allocation2 + $0xa0] sm:$0xff] %v340
    %345 = vst [vmem:[#allocation2 + $0xa8] sm:$0xff] %v341
    %346 = vst [vmem:[#allocation2 + $0xb0] sm:$0xff] %v342
    %347 = vst [vmem:[#allocation2 + $0xb8] sm:$0xff] %v343
    %348 = vrot.lane.b32.xlu0 %v164, 113
    %v349 = vpop.permute.xlu0 %348
    %350 = vrot.lane.b32.xlu0 %v165, 113
    %v351 = vpop.permute.xlu0 %350
    %352 = vrot.lane.b32.xlu0 %v166, 113
    %v353 = vpop.permute.xlu0 %352
    %354 = vrot.lane.b32.xlu0 %v167, 113
    %v355 = vpop.permute.xlu0 %354
    %vm356 = vcmp.lt.s32.totalorder %v177, 113
    %v357 = vsel %vm356, %v353, %v355
    %v358 = vsel %vm356, %v351, %v353
    %v359 = vsel %vm356, %v349, %v351
    %v360 = vsel %vm356, %v355, %v349
    %s361 = scalar_lea.vmem %s2, 6
    %v362 = vld [vmem:[%s361] ss:$8 sm:$0xf]
    %v364 = vperm.slane %v362, 0
    %v365 = vperm.slane %v362, 1
    %v366 = vperm.slane %v362, 2
    %v367 = vperm.slane %v362, 3
    %v372 = vmul.f32 %v359, %v364
    %v373 = vmul.f32 %v358, %v365
    %v374 = vmul.f32 %v357, %v366
    %v375 = vmul.f32 %v360, %v367
    %376 = vst [vmem:[#allocation2 + $0xc0] sm:$0xff] %v372
    %377 = vst [vmem:[#allocation2 + $0xc8] sm:$0xff] %v373
    %378 = vst [vmem:[#allocation2 + $0xd0] sm:$0xff] %v374
    %379 = vst [vmem:[#allocation2 + $0xd8] sm:$0xff] %v375
    %380 = vrot.lane.b32.xlu0 %v164, 112
    %v381 = vpop.permute.xlu0 %380
    %382 = vrot.lane.b32.xlu0 %v165, 112
    %v383 = vpop.permute.xlu0 %382
    %384 = vrot.lane.b32.xlu0 %v166, 112
    %v385 = vpop.permute.xlu0 %384
    %386 = vrot.lane.b32.xlu0 %v167, 112
    %v387 = vpop.permute.xlu0 %386
    %vm388 = vcmp.lt.s32.totalorder %v177, 112
    %v389 = vsel %vm388, %v385, %v387
    %v390 = vsel %vm388, %v383, %v385
    %v391 = vsel %vm388, %v381, %v383
    %v392 = vsel %vm388, %v387, %v381
    %s393 = scalar_lea.vmem %s2, 7
    %v394 = vld [vmem:[%s393] ss:$8 sm:$0xf]
    %v396 = vperm.slane %v394, 0
    %v397 = vperm.slane %v394, 1
    %v398 = vperm.slane %v394, 2
    %v399 = vperm.slane %v394, 3
    %v404 = vmul.f32 %v391, %v396
    %v405 = vmul.f32 %v390, %v397
    %v406 = vmul.f32 %v389, %v398
    %v407 = vmul.f32 %v392, %v399
    %408 = vst [vmem:[#allocation2 + $0xe0] sm:$0xff] %v404
    %409 = vst [vmem:[#allocation2 + $0xe8] sm:$0xff] %v405
    %410 = vst [vmem:[#allocation2 + $0xf0] sm:$0xff] %v406
    %411 = vst [vmem:[#allocation2 + $0xf8] sm:$0xff] %v407
    %412 = vrot.lane.b32.xlu0 %v164, 111
    %v413 = vpop.permute.xlu0 %412
    %414 = vrot.lane.b32.xlu0 %v165, 111
    %v415 = vpop.permute.xlu0 %414
    %416 = vrot.lane.b32.xlu0 %v166, 111
    %v417 = vpop.permute.xlu0 %416
    %418 = vrot.lane.b32.xlu0 %v167, 111
    %v419 = vpop.permute.xlu0 %418
    %vm420 = vcmp.lt.s32.totalorder %v177, 111
    %v421 = vsel %vm420, %v417, %v419
    %v422 = vsel %vm420, %v415, %v417
    %v423 = vsel %vm420, %v413, %v415
    %v424 = vsel %vm420, %v419, %v413
    %s425 = scalar_lea.vmem %s2, 32
    %v426 = vld [vmem:[%s425] ss:$8 sm:$0xf]
    %v428 = vperm.slane %v426, 0
    %v429 = vperm.slane %v426, 1
    %v430 = vperm.slane %v426, 2
    %v431 = vperm.slane %v426, 3
    %v436 = vmul.f32 %v423, %v428
    %v437 = vmul.f32 %v422, %v429
    %v438 = vmul.f32 %v421, %v430
    %v439 = vmul.f32 %v424, %v431
    %440 = vst [vmem:[#allocation2 + $0x100] sm:$0xff] %v436
    %441 = vst [vmem:[#allocation2 + $0x108] sm:$0xff] %v437
    %442 = vst [vmem:[#allocation2 + $0x110] sm:$0xff] %v438
    %443 = vst [vmem:[#allocation2 + $0x118] sm:$0xff] %v439
    %v444 = vld [vmem:[#allocation2] sm:$0xff]
    %v445 = vld [vmem:[#allocation2 + $0x8] sm:$0xff]
    %v446 = vld [vmem:[#allocation2 + $0x10] sm:$0xff]
    %v447 = vld [vmem:[#allocation2 + $0x18] sm:$0xff]
    %v448 = vld [vmem:[#allocation2 + $0x20] sm:$0xff]
    %v449 = vld [vmem:[#allocation2 + $0x28] sm:$0xff]
    %v450 = vld [vmem:[#allocation2 + $0x30] sm:$0xff]
    %v451 = vld [vmem:[#allocation2 + $0x38] sm:$0xff]
    %v452 = vld [vmem:[#allocation2 + $0x40] sm:$0xff]
    %v453 = vld [vmem:[#allocation2 + $0x48] sm:$0xff]
    %v454 = vld [vmem:[#allocation2 + $0x50] sm:$0xff]
    %v455 = vld [vmem:[#allocation2 + $0x58] sm:$0xff]
    %v456 = vld [vmem:[#allocation2 + $0x60] sm:$0xff]
    %v457 = vld [vmem:[#allocation2 + $0x68] sm:$0xff]
    %v458 = vld [vmem:[#allocation2 + $0x70] sm:$0xff]
    %v459 = vld [vmem:[#allocation2 + $0x78] sm:$0xff]
    %v460 = vld [vmem:[#allocation2 + $0x80] sm:$0xff]
    %v461 = vld [vmem:[#allocation2 + $0x88] sm:$0xff]
    %v462 = vld [vmem:[#allocation2 + $0x90] sm:$0xff]
    %v463 = vld [vmem:[#allocation2 + $0x98] sm:$0xff]
    %v464 = vld [vmem:[#allocation2 + $0xa0] sm:$0xff]
    %v465 = vld [vmem:[#allocation2 + $0xa8] sm:$0xff]
    %v466 = vld [vmem:[#allocation2 + $0xb0] sm:$0xff]
    %v467 = vld [vmem:[#allocation2 + $0xb8] sm:$0xff]
    %v468 = vld [vmem:[#allocation2 + $0xc0] sm:$0xff]
    %v469 = vld [vmem:[#allocation2 + $0xc8] sm:$0xff]
    %v470 = vld [vmem:[#allocation2 + $0xd0] sm:$0xff]
    %v471 = vld [vmem:[#allocation2 + $0xd8] sm:$0xff]
    %v472 = vld [vmem:[#allocation2 + $0xe0] sm:$0xff]
    %v473 = vld [vmem:[#allocation2 + $0xe8] sm:$0xff]
    %v474 = vld [vmem:[#allocation2 + $0xf0] sm:$0xff]
    %v475 = vld [vmem:[#allocation2 + $0xf8] sm:$0xff]
    %v476 = vld [vmem:[#allocation2 + $0x100] sm:$0xff]
    %v477 = vld [vmem:[#allocation2 + $0x108] sm:$0xff]
    %v478 = vld [vmem:[#allocation2 + $0x110] sm:$0xff]
    %v479 = vld [vmem:[#allocation2 + $0x118] sm:$0xff]
    %480 = vset.pattern.permute.xlu0 77
    %481 = vperm.xlu0 %480, %v52
    %v482 = vpop.permute.xlu0 %481
    %484 = vrot.lane.b32.xlu0 %v52, 123
    %v485 = vpop.permute.xlu0 %484
    %vm486 = vcmask 588800
    %v487 = vsel %vm486, %v485, 0
    %489 = vmatpush.msra.mxu0 0.0
    %490 = vmatpush.msra.mxu0 0.0
    %491 = vmatpush.msra.mxu0 0.0
    %492 = vmatpush.msra.mxu0 0.0
    %493 = vmatpush.msra.mxu0 0.0
    %494 = vmatpush.msra.mxu0 0.0
    %495 = vmatpush.msra.mxu0 0.0
    %496 = vmatpush.msra.mxu0 %v476
    %497 = vmatpush.msra.mxu0 %v472
    %498 = vmatpush.msra.mxu0 %v468
    %499 = vmatpush.msra.mxu0 %v464
    %500 = vmatpush.msra.mxu0 %v460
    %501 = vmatpush.msra.mxu0 %v456
    %502 = vmatpush.msra.mxu0 %v452
    %503 = vmatpush.msra.mxu0 %v448
    %504 = vmatpush.msra.mxu0 %v444
    %505 = vmatmul.f32.gmra.mxu0 %v487
    %v506 = vpop.f32.mrf.mxu0
    %v507 = vadd.f32 %v482, %v506
    %508 = vdwg.mxu0
    %509 = vmatpush.msra.mxu0 0.0
    %510 = vmatpush.msra.mxu0 0.0
    %511 = vmatpush.msra.mxu0 0.0
    %512 = vmatpush.msra.mxu0 0.0
    %513 = vmatpush.msra.mxu0 0.0
    %514 = vmatpush.msra.mxu0 0.0
    %515 = vmatpush.msra.mxu0 0.0
    %516 = vmatpush.msra.mxu0 %v477
    %517 = vmatpush.msra.mxu0 %v473
    %518 = vmatpush.msra.mxu0 %v469
    %519 = vmatpush.msra.mxu0 %v465
    %520 = vmatpush.msra.mxu0 %v461
    %521 = vmatpush.msra.mxu0 %v457
    %522 = vmatpush.msra.mxu0 %v453
    %523 = vmatpush.msra.mxu0 %v449
    %524 = vmatpush.msra.mxu0 %v445
    %525 = vmatmul.f32.gmra.mxu0 %v487
    %v526 = vpop.f32.mrf.mxu0
    %v527 = vadd.f32 %v482, %v526
    %528 = vdwg.mxu0
    %529 = vmatpush.msra.mxu0 0.0
    %530 = vmatpush.msra.mxu0 0.0
    %531 = vmatpush.msra.mxu0 0.0
    %532 = vmatpush.msra.mxu0 0.0
    %533 = vmatpush.msra.mxu0 0.0
    %534 = vmatpush.msra.mxu0 0.0
    %535 = vmatpush.msra.mxu0 0.0
    %536 = vmatpush.msra.mxu0 %v478
    %537 = vmatpush.msra.mxu0 %v474
    %538 = vmatpush.msra.mxu0 %v470
    %539 = vmatpush.msra.mxu0 %v466
    %540 = vmatpush.msra.mxu0 %v462
    %541 = vmatpush.msra.mxu0 %v458
    %542 = vmatpush.msra.mxu0 %v454
    %543 = vmatpush.msra.mxu0 %v450
    %544 = vmatpush.msra.mxu0 %v446
    %545 = vmatmul.f32.gmra.mxu0 %v487
    %v546 = vpop.f32.mrf.mxu0
    %v547 = vadd.f32 %v482, %v546
    %548 = vdwg.mxu0
    %549 = vmatpush.msra.mxu0 0.0
    %550 = vmatpush.msra.mxu0 0.0
    %551 = vmatpush.msra.mxu0 0.0
    %552 = vmatpush.msra.mxu0 0.0
    %553 = vmatpush.msra.mxu0 0.0
    %554 = vmatpush.msra.mxu0 0.0
    %555 = vmatpush.msra.mxu0 0.0
    %556 = vmatpush.msra.mxu0 %v479
    %557 = vmatpush.msra.mxu0 %v475
    %558 = vmatpush.msra.mxu0 %v471
    %559 = vmatpush.msra.mxu0 %v467
    %560 = vmatpush.msra.mxu0 %v463
    %561 = vmatpush.msra.mxu0 %v459
    %562 = vmatpush.msra.mxu0 %v455
    %563 = vmatpush.msra.mxu0 %v451
    %564 = vmatpush.msra.mxu0 %v447
    %565 = vmatmul.f32.gmra.mxu0 %v487
    %v566 = vpop.f32.mrf.mxu0
    %v567 = vadd.f32 %v482, %v566
    %568 = vdwg.mxu0
    %v569 = vmax.f32 %v507, 0.0
    %v570 = vmax.f32 %v527, 0.0
    %v571 = vmax.f32 %v547, 0.0
    %v572 = vmax.f32 %v567, 0.0
    %573 = vrot.lane.b32.xlu0 %v569, 127
    %v574 = vpop.permute.xlu0 %573
    %575 = vrot.lane.b32.xlu0 %v570, 127
    %v576 = vpop.permute.xlu0 %575
    %577 = vrot.lane.b32.xlu0 %v571, 127
    %v578 = vpop.permute.xlu0 %577
    %579 = vrot.lane.b32.xlu0 %v572, 127
    %v580 = vpop.permute.xlu0 %579
    %v581 = vsel %vm324, %v578, %v580
    %v582 = vsel %vm324, %v576, %v578
    %v583 = vsel %vm324, %v574, %v576
    %v584 = vsel %vm324, %v580, %v574
    %v585 = vmax.f32 %v569, %v583
    %v586 = vmax.f32 %v570, %v582
    %v587 = vmax.f32 %v571, %v581
    %v588 = vmax.f32 %v572, %v584
    %589 = vrot.lane.b32.xlu0 %v585, 112
    %v590 = vpop.permute.xlu0 %589
    %591 = vrot.lane.b32.xlu0 %v586, 112
    %v592 = vpop.permute.xlu0 %591
    %593 = vrot.lane.b32.xlu0 %v587, 112
    %v594 = vpop.permute.xlu0 %593
    %595 = vrot.lane.b32.xlu0 %v588, 112
    %v596 = vpop.permute.xlu0 %595
    %v597 = vsel %vm388, %v594, %v596
    %v598 = vsel %vm388, %v592, %v594
    %v599 = vsel %vm388, %v590, %v592
    %v600 = vsel %vm388, %v596, %v590
    %v601 = vmax.f32 %v585, %v599
    %v602 = vmax.f32 %v586, %v598
    %v603 = vmax.f32 %v587, %v597
    %v604 = vmax.f32 %v588, %v600
    %v605 = vld [vmem:[#allocation3] sm:$0xff]
    %v606 = vld [vmem:[#allocation3 + $0x8] sm:$0xff]
    %v607 = vld [vmem:[#allocation3 + $0x10] sm:$0xff]
    %v608 = vld [vmem:[#allocation3 + $0x18] sm:$0xff]
    %v609 = vld [vmem:[#allocation3 + $0x20] sm:$0xff]
    %v610 = vld [vmem:[#allocation3 + $0x28] sm:$0xff]
    %v611 = vld [vmem:[#allocation3 + $0x30] sm:$0xff]
    %v612 = vld [vmem:[#allocation3 + $0x38] sm:$0xff]
    %v613 = vld [vmem:[#allocation3 + $0x40] sm:$0xff]
    %v614 = vld [vmem:[#allocation3 + $0x48] sm:$0xff]
    %v615 = vld [vmem:[#allocation3 + $0x50] sm:$0xff]
    %v616 = vld [vmem:[#allocation3 + $0x58] sm:$0xff]
    %v617 = vld [vmem:[#allocation3 + $0x60] sm:$0xff]
    %v618 = vld [vmem:[#allocation3 + $0x68] sm:$0xff]
    %v619 = vld [vmem:[#allocation3 + $0x70] sm:$0xff]
    %v620 = vld [vmem:[#allocation3 + $0x78] sm:$0xff]
    %v621 = vld [vmem:[#allocation3 + $0x80] sm:$0xff]
    %v622 = vld [vmem:[#allocation3 + $0x88] sm:$0xff]
    %v623 = vld [vmem:[#allocation3 + $0x90] sm:$0xff]
    %v624 = vld [vmem:[#allocation3 + $0x98] sm:$0xff]
    %v625 = vld [vmem:[#allocation3 + $0xa0] sm:$0xff]
    %v626 = vld [vmem:[#allocation3 + $0xa8] sm:$0xff]
    %v627 = vld [vmem:[#allocation3 + $0xb0] sm:$0xff]
    %v628 = vld [vmem:[#allocation3 + $0xb8] sm:$0xff]
    %v629 = vld [vmem:[#allocation3 + $0xc0] sm:$0xff]
    %v630 = vld [vmem:[#allocation3 + $0xc8] sm:$0xff]
    %v631 = vld [vmem:[#allocation3 + $0xd0] sm:$0xff]
    %v632 = vld [vmem:[#allocation3 + $0xd8] sm:$0xff]
    %v633 = vld [vmem:[#allocation3 + $0xe0] sm:$0xff]
    %v634 = vld [vmem:[#allocation3 + $0xe8] sm:$0xff]
    %v635 = vld [vmem:[#allocation3 + $0xf0] sm:$0xff]
    %v636 = vld [vmem:[#allocation3 + $0xf8] sm:$0xff]
    %v637 = vld [vmem:[#allocation3 + $0x100] sm:$0xff]
    %v638 = vld [vmem:[#allocation3 + $0x108] sm:$0xff]
    %v639 = vld [vmem:[#allocation3 + $0x110] sm:$0xff]
    %v640 = vld [vmem:[#allocation3 + $0x118] sm:$0xff]
    %v641 = vld [vmem:[#allocation3 + $0x120] sm:$0xff]
    %v642 = vld [vmem:[#allocation3 + $0x128] sm:$0xff]
    %v643 = vld [vmem:[#allocation3 + $0x130] sm:$0xff]
    %v644 = vld [vmem:[#allocation3 + $0x138] sm:$0xff]
    %v645 = vld [vmem:[#allocation3 + $0x140] sm:$0xff]
    %v646 = vld [vmem:[#allocation3 + $0x148] sm:$0xff]
    %v647 = vld [vmem:[#allocation3 + $0x150] sm:$0xff]
    %v648 = vld [vmem:[#allocation3 + $0x158] sm:$0xff]
    %v649 = vld [vmem:[#allocation3 + $0x160] sm:$0xff]
    %v650 = vld [vmem:[#allocation3 + $0x168] sm:$0xff]
    %v651 = vld [vmem:[#allocation3 + $0x170] sm:$0xff]
    %v652 = vld [vmem:[#allocation3 + $0x178] sm:$0xff]
    %v653 = vld [vmem:[#allocation3 + $0x180] sm:$0xff]
    %v654 = vld [vmem:[#allocation3 + $0x188] sm:$0xff]
    %v655 = vld [vmem:[#allocation3 + $0x190] sm:$0xff]
    %v656 = vld [vmem:[#allocation3 + $0x198] sm:$0xff]
    %v657 = vld [vmem:[#allocation3 + $0x1a0] sm:$0xff]
    %v658 = vld [vmem:[#allocation3 + $0x1a8] sm:$0xff]
    %v659 = vld [vmem:[#allocation3 + $0x1b0] sm:$0xff]
    %v660 = vld [vmem:[#allocation3 + $0x1b8] sm:$0xff]
    %v661 = vld [vmem:[#allocation3 + $0x1c0] sm:$0xff]
    %v662 = vld [vmem:[#allocation3 + $0x1c8] sm:$0xff]
    %v663 = vld [vmem:[#allocation3 + $0x1d0] sm:$0xff]
    %v664 = vld [vmem:[#allocation3 + $0x1d8] sm:$0xff]
    %v665 = vld [vmem:[#allocation3 + $0x1e0] sm:$0xff]
    %v666 = vld [vmem:[#allocation3 + $0x1e8] sm:$0xff]
    %v667 = vld [vmem:[#allocation3 + $0x1f0] sm:$0xff]
    %v668 = vld [vmem:[#allocation3 + $0x1f8] sm:$0xff]
    %669 = vmatpush.msra.mxu0 %v620
    %670 = vmatpush.msra.mxu0 %v619
    %671 = vmatpush.msra.mxu0 %v618
    %672 = vmatpush.msra.mxu0 %v617
    %673 = vmatpush.msra.mxu0 %v616
    %674 = vmatpush.msra.mxu0 %v615
    %675 = vmatpush.msra.mxu0 %v614
    %676 = vmatpush.msra.mxu0 %v613
    %677 = vmatpush.msra.mxu0 %v612
    %678 = vmatpush.msra.mxu0 %v611
    %679 = vmatpush.msra.mxu0 %v610
    %680 = vmatpush.msra.mxu0 %v609
    %681 = vmatpush.msra.mxu0 %v608
    %682 = vmatpush.msra.mxu0 %v607
    %683 = vmatpush.msra.mxu0 %v606
    %684 = vmatpush.msra.mxu0 %v605
    %685 = vmatmul.f32.gmra.mxu0 %v601
    %v686 = vpop.f32.mrf.mxu0
    %v687 = vadd.f32 0.0, %v686
    %688 = vdwg.mxu0
    %689 = vmatpush.msra.mxu0 %v636
    %690 = vmatpush.msra.mxu0 %v635
    %691 = vmatpush.msra.mxu0 %v634
    %692 = vmatpush.msra.mxu0 %v633
    %693 = vmatpush.msra.mxu0 %v632
    %694 = vmatpush.msra.mxu0 %v631
    %695 = vmatpush.msra.mxu0 %v630
    %696 = vmatpush.msra.mxu0 %v629
    %697 = vmatpush.msra.mxu0 %v628
    %698 = vmatpush.msra.mxu0 %v627
    %699 = vmatpush.msra.mxu0 %v626
    %700 = vmatpush.msra.mxu0 %v625
    %701 = vmatpush.msra.mxu0 %v624
    %702 = vmatpush.msra.mxu0 %v623
    %703 = vmatpush.msra.mxu0 %v622
    %704 = vmatpush.msra.mxu0 %v621
    %705 = vmatmul.f32.gmra.mxu0 %v602
    %v706 = vpop.f32.mrf.mxu0
    %v707 = vadd.f32 %v687, %v706
    %708 = vdwg.mxu0
    %709 = vmatpush.msra.mxu0 %v652
    %710 = vmatpush.msra.mxu0 %v651
    %711 = vmatpush.msra.mxu0 %v650
    %712 = vmatpush.msra.mxu0 %v649
    %713 = vmatpush.msra.mxu0 %v648
    %714 = vmatpush.msra.mxu0 %v647
    %715 = vmatpush.msra.mxu0 %v646
    %716 = vmatpush.msra.mxu0 %v645
    %717 = vmatpush.msra.mxu0 %v644
    %718 = vmatpush.msra.mxu0 %v643
    %719 = vmatpush.msra.mxu0 %v642
    %720 = vmatpush.msra.mxu0 %v641
    %721 = vmatpush.msra.mxu0 %v640
    %722 = vmatpush.msra.mxu0 %v639
    %723 = vmatpush.msra.mxu0 %v638
    %724 = vmatpush.msra.mxu0 %v637
    %725 = vmatmul.f32.gmra.mxu0 %v603
    %v726 = vpop.f32.mrf.mxu0
    %v727 = vadd.f32 %v707, %v726
    %728 = vdwg.mxu0
    %729 = vmatpush.msra.mxu0 %v668
    %730 = vmatpush.msra.mxu0 %v667
    %731 = vmatpush.msra.mxu0 %v666
    %732 = vmatpush.msra.mxu0 %v665
    %733 = vmatpush.msra.mxu0 %v664
    %734 = vmatpush.msra.mxu0 %v663
    %735 = vmatpush.msra.mxu0 %v662
    %736 = vmatpush.msra.mxu0 %v661
    %737 = vmatpush.msra.mxu0 %v660
    %738 = vmatpush.msra.mxu0 %v659
    %739 = vmatpush.msra.mxu0 %v658
    %740 = vmatpush.msra.mxu0 %v657
    %741 = vmatpush.msra.mxu0 %v656
    %742 = vmatpush.msra.mxu0 %v655
    %743 = vmatpush.msra.mxu0 %v654
    %744 = vmatpush.msra.mxu0 %v653
    %745 = vmatmul.f32.gmra.mxu0 %v604
    %v746 = vpop.f32.mrf.mxu0
    %v747 = vadd.f32 %v727, %v746
    %748 = vdwg.mxu0
    %749 = vrot.lane.b32.xlu0 %v747, 9
    %v750 = vpop.permute.xlu0 %749
    %v751 = vld [vmem:[%s2 + $0x21] ss:$0 sm:$0xff]
    %v752 = vmul.f32 %v750, %v751
    %753 = vst [vmem:[#allocation2] sm:$0xff] %v752
    %754 = vrot.lane.b32.xlu0 %v747, 8
    %v755 = vpop.permute.xlu0 %754
    %v756 = vld [vmem:[%s2 + $0x22] ss:$0 sm:$0xff]
    %v757 = vmul.f32 %v755, %v756
    %758 = vst [vmem:[#allocation2 + $0x20] sm:$0xff] %v757
    %759 = vrot.lane.b32.xlu0 %v747, 7
    %v760 = vpop.permute.xlu0 %759
    %v761 = vld [vmem:[%s2 + $0x23] ss:$0 sm:$0xff]
    %v762 = vmul.f32 %v760, %v761
    %763 = vst [vmem:[#allocation2 + $0x40] sm:$0xff] %v762
    %764 = vrot.lane.b32.xlu0 %v747, 1
    %v765 = vpop.permute.xlu0 %764
    %v766 = vld [vmem:[%s2 + $0x24] ss:$0 sm:$0xff]
    %v767 = vmul.f32 %v765, %v766
    %768 = vst [vmem:[#allocation2 + $0x60] sm:$0xff] %v767
    %v769 = vld [vmem:[%s2 + $0x25] ss:$0 sm:$0xff]
    %v770 = vmul.f32 %v747, %v769
    %771 = vst [vmem:[#allocation2 + $0x80] sm:$0xff] %v770
    %772 = vrot.lane.b32.xlu0 %v747, 127
    %v773 = vpop.permute.xlu0 %772
    %v774 = vld [vmem:[%s2 + $0x26] ss:$0 sm:$0xff]
    %v775 = vmul.f32 %v773, %v774
    %776 = vst [vmem:[#allocation2 + $0xa0] sm:$0xff] %v775
    %777 = vrot.lane.b32.xlu0 %v747, 121
    %v778 = vpop.permute.xlu0 %777
    %v779 = vld [vmem:[%s2 + $0x27] ss:$0 sm:$0xff]
    %v780 = vmul.f32 %v778, %v779
    %781 = vst [vmem:[#allocation2 + $0xc0] sm:$0xff] %v780
    %782 = vrot.lane.b32.xlu0 %v747, 120
    %v783 = vpop.permute.xlu0 %782
    %v784 = vld [vmem:[%s2 + $0x40] ss:$0 sm:$0xff]
    %v785 = vmul.f32 %v783, %v784
    %786 = vst [vmem:[#allocation2 + $0xe0] sm:$0xff] %v785
    %787 = vrot.lane.b32.xlu0 %v747, 119
    %v788 = vpop.permute.xlu0 %787
    %v789 = vld [vmem:[%s2 + $0x41] ss:$0 sm:$0xff]
    %v790 = vmul.f32 %v788, %v789
    %791 = vst [vmem:[#allocation2 + $0x100] sm:$0xff] %v790
    %v792 = vld [vmem:[#allocation2] sm:$0xff]
    %v793 = vld [vmem:[#allocation2 + $0x20] sm:$0xff]
    %v794 = vld [vmem:[#allocation2 + $0x40] sm:$0xff]
    %v795 = vld [vmem:[#allocation2 + $0x60] sm:$0xff]
    %v796 = vld [vmem:[#allocation2 + $0x80] sm:$0xff]
    %v797 = vld [vmem:[#allocation2 + $0xa0] sm:$0xff]
    %v798 = vld [vmem:[#allocation2 + $0xc0] sm:$0xff]
    %v799 = vld [vmem:[#allocation2 + $0xe0] sm:$0xff]
    %v800 = vld [vmem:[#allocation2 + $0x100] sm:$0xff]
    %802 = vset.pattern.permute.xlu0 22
    %803 = vperm.xlu0 %802, %v54
    %v804 = vpop.permute.xlu0 %803
    %807 = vrot.lane.b32.xlu0 %v53, 50
    %v808 = vpop.permute.xlu0 %807
    %809 = vrot.lane.b32.xlu0 %v54, 50
    %v810 = vpop.permute.xlu0 %809
    %vm811 = vcmask 408576
    %v812 = vsel %vm811, %v808, %v810
    %v813 = vsel %vm486, %v812, 0
    %815 = vmatpush.msra.mxu0 0.0
    %816 = vmatpush.msra.mxu0 0.0
    %817 = vmatpush.msra.mxu0 0.0
    %818 = vmatpush.msra.mxu0 0.0
    %819 = vmatpush.msra.mxu0 0.0
    %820 = vmatpush.msra.mxu0 0.0
    %821 = vmatpush.msra.mxu0 0.0
    %822 = vmatpush.msra.mxu0 %v800
    %823 = vmatpush.msra.mxu0 %v799
    %824 = vmatpush.msra.mxu0 %v798
    %825 = vmatpush.msra.mxu0 %v797
    %826 = vmatpush.msra.mxu0 %v796
    %827 = vmatpush.msra.mxu0 %v795
    %828 = vmatpush.msra.mxu0 %v794
    %829 = vmatpush.msra.mxu0 %v793
    %830 = vmatpush.msra.mxu0 %v792
    %831 = vmatmul.f32.gmra.mxu0 %v813
    %v832 = vpop.f32.mrf.mxu0
    %v833 = vadd.f32 %v804, %v832
    %834 = vdwg.mxu0
    %v835 = vmax.f32 %v833, 0.0
    %837 = vrot.lane.b32.xlu0 %v55, 105
    %v838 = vpop.permute.xlu0 %837
    %vm839 = vcmask 64512
    %v840 = vsel %vm839, %v838, 0
    %842 = vmatpush.msra.mxu0 0.0
    %843 = vmatpush.msra.mxu0 0.0
    %844 = vmatpush.msra.mxu0 0.0
    %845 = vmatpush.msra.mxu0 0.0
    %846 = vmatpush.msra.mxu0 0.0
    %847 = vmatpush.msra.mxu0 0.0
    %848 = vmatpush.msra.mxu0 0.0
    %849 = vmatpush.msra.mxu0 0.0
    %850 = vmatpush.msra.mxu0 0.0
    %851 = vmatpush.msra.mxu0 0.0
    %852 = vmatpush.msra.mxu0 0.0
    %853 = vmatpush.msra.mxu0 0.0
    %854 = vmatpush.msra.mxu0 0.0
    %855 = vmatpush.msra.mxu0 0.0
    %856 = vmatpush.msra.mxu0 0.0
    %857 = vmatpush.msra.mxu0 %v835
    %858 = vmatmul.f32.gmra.mxu0 %v840
    %v859 = vpop.f32.mrf.mxu0
    %v860 = vadd.f32 0.0, %v859
    %861 = vdwg.mxu0
    %v862 = vld [vmem:[#allocation5] sm:$0xff]
    %v863 = vld [vmem:[#allocation5 + $0x8] sm:$0xff]
    %v864 = vld [vmem:[#allocation5 + $0x10] sm:$0xff]
    %v865 = vld [vmem:[#allocation5 + $0x18] sm:$0xff]
    %v866 = vld [vmem:[#allocation5 + $0x20] sm:$0xff]
    %v867 = vld [vmem:[#allocation5 + $0x28] sm:$0xff]
    %v868 = vld [vmem:[#allocation5 + $0x30] sm:$0xff]
    %v869 = vld [vmem:[#allocation5 + $0x38] sm:$0xff]
    %v870 = vld [vmem:[#allocation5 + $0x40] sm:$0xff]
    %v871 = vld [vmem:[#allocation5 + $0x48] sm:$0xff]
    %v872 = vld [vmem:[#allocation5 + $0x50] sm:$0xff]
    %v873 = vld [vmem:[#allocation5 + $0x58] sm:$0xff]
    %v874 = vld [vmem:[#allocation5 + $0x60] sm:$0xff]
    %v875 = vld [vmem:[#allocation5 + $0x68] sm:$0xff]
    %v876 = vld [vmem:[#allocation5 + $0x70] sm:$0xff]
    %v877 = vld [vmem:[#allocation5 + $0x78] sm:$0xff]
    %v878 = vld [vmem:[#allocation5 + $0x80] sm:$0xff]
    %v879 = vld [vmem:[#allocation5 + $0x88] sm:$0xff]
    %v880 = vld [vmem:[#allocation5 + $0x90] sm:$0xff]
    %v881 = vld [vmem:[#allocation5 + $0x98] sm:$0xff]
    %v882 = vld [vmem:[#allocation5 + $0xa0] sm:$0xff]
    %v883 = vld [vmem:[#allocation5 + $0xa8] sm:$0xff]
    %v884 = vld [vmem:[#allocation5 + $0xb0] sm:$0xff]
    %v885 = vld [vmem:[#allocation5 + $0xb8] sm:$0xff]
    %v886 = vld [vmem:[#allocation5 + $0xc0] sm:$0xff]
    %v887 = vld [vmem:[#allocation5 + $0xc8] sm:$0xff]
    %v888 = vld [vmem:[#allocation5 + $0xd0] sm:$0xff]
    %v889 = vld [vmem:[#allocation5 + $0xd8] sm:$0xff]
    %v890 = vld [vmem:[#allocation5 + $0xe0] sm:$0xff]
    %v891 = vld [vmem:[#allocation5 + $0xe8] sm:$0xff]
    %v892 = vld [vmem:[#allocation5 + $0xf0] sm:$0xff]
    %v893 = vld [vmem:[#allocation5 + $0xf8] sm:$0xff]
    %v894 = vld [vmem:[#allocation5 + $0x100] sm:$0xff]
    %v895 = vld [vmem:[#allocation5 + $0x108] sm:$0xff]
    %v896 = vld [vmem:[#allocation5 + $0x110] sm:$0xff]
    %v897 = vld [vmem:[#allocation5 + $0x118] sm:$0xff]
    %v898 = vld [vmem:[#allocation5 + $0x120] sm:$0xff]
    %v899 = vld [vmem:[#allocation5 + $0x128] sm:$0xff]
    %v900 = vld [vmem:[#allocation5 + $0x130] sm:$0xff]
    %v901 = vld [vmem:[#allocation5 + $0x138] sm:$0xff]
    %v902 = vld [vmem:[#allocation5 + $0x140] sm:$0xff]
    %v903 = vld [vmem:[#allocation5 + $0x148] sm:$0xff]
    %v904 = vld [vmem:[#allocation5 + $0x150] sm:$0xff]
    %v905 = vld [vmem:[#allocation5 + $0x158] sm:$0xff]
    %v906 = vld [vmem:[#allocation5 + $0x160] sm:$0xff]
    %v907 = vld [vmem:[#allocation5 + $0x168] sm:$0xff]
    %v908 = vld [vmem:[#allocation5 + $0x170] sm:$0xff]
    %v909 = vld [vmem:[#allocation5 + $0x178] sm:$0xff]
    %v910 = vld [vmem:[#allocation5 + $0x180] sm:$0xff]
    %v911 = vld [vmem:[#allocation5 + $0x188] sm:$0xff]
    %v912 = vld [vmem:[#allocation5 + $0x190] sm:$0xff]
    %v913 = vld [vmem:[#allocation5 + $0x198] sm:$0xff]
    %v914 = vld [vmem:[#allocation5 + $0x1a0] sm:$0xff]
    %v915 = vld [vmem:[#allocation5 + $0x1a8] sm:$0xff]
    %v916 = vld [vmem:[#allocation5 + $0x1b0] sm:$0xff]
    %v917 = vld [vmem:[#allocation5 + $0x1b8] sm:$0xff]
    %v918 = vld [vmem:[#allocation5 + $0x1c0] sm:$0xff]
    %v919 = vld [vmem:[#allocation5 + $0x1c8] sm:$0xff]
    %v920 = vld [vmem:[#allocation5 + $0x1d0] sm:$0xff]
    %v921 = vld [vmem:[#allocation5 + $0x1d8] sm:$0xff]
    %v922 = vld [vmem:[#allocation5 + $0x1e0] sm:$0xff]
    %v923 = vld [vmem:[#allocation5 + $0x1e8] sm:$0xff]
    %v924 = vld [vmem:[#allocation5 + $0x1f0] sm:$0xff]
    %v925 = vld [vmem:[#allocation5 + $0x1f8] sm:$0xff]
    %926 = vrot.lane.b32.xlu0 %v55, 97
    %v927 = vpop.permute.xlu0 %926
    %v928 = vsel %vm839, %v927, 0
    %930 = vmatpush.msra.mxu0 0.0
    %931 = vmatpush.msra.mxu0 0.0
    %932 = vmatpush.msra.mxu0 0.0
    %933 = vmatpush.msra.mxu0 0.0
    %934 = vmatpush.msra.mxu0 0.0
    %935 = vmatpush.msra.mxu0 0.0
    %936 = vmatpush.msra.mxu0 0.0
    %937 = vmatpush.msra.mxu0 0.0
    %938 = vmatpush.msra.mxu0 0.0
    %939 = vmatpush.msra.mxu0 0.0
    %940 = vmatpush.msra.mxu0 0.0
    %941 = vmatpush.msra.mxu0 0.0
    %942 = vmatpush.msra.mxu0 0.0
    %943 = vmatpush.msra.mxu0 0.0
    %944 = vmatpush.msra.mxu0 0.0
    %945 = vmatpush.msra.mxu0 %v569
    %946 = vmatmul.f32.gmra.mxu0 %v928
    %v947 = vpop.f32.mrf.mxu0
    %v948 = vadd.f32 0.0, %v947
    %949 = vdwg.mxu0
    %950 = vmatpush.msra.mxu0 0.0
    %951 = vmatpush.msra.mxu0 0.0
    %952 = vmatpush.msra.mxu0 0.0
    %953 = vmatpush.msra.mxu0 0.0
    %954 = vmatpush.msra.mxu0 0.0
    %955 = vmatpush.msra.mxu0 0.0
    %956 = vmatpush.msra.mxu0 0.0
    %957 = vmatpush.msra.mxu0 0.0
    %958 = vmatpush.msra.mxu0 0.0
    %959 = vmatpush.msra.mxu0 0.0
    %960 = vmatpush.msra.mxu0 0.0
    %961 = vmatpush.msra.mxu0 0.0
    %962 = vmatpush.msra.mxu0 0.0
    %963 = vmatpush.msra.mxu0 0.0
    %964 = vmatpush.msra.mxu0 0.0
    %965 = vmatpush.msra.mxu0 %v570
    %966 = vmatmul.f32.gmra.mxu0 %v928
    %v967 = vpop.f32.mrf.mxu0
    %v968 = vadd.f32 0.0, %v967
    %969 = vdwg.mxu0
    %970 = vmatpush.msra.mxu0 0.0
    %971 = vmatpush.msra.mxu0 0.0
    %972 = vmatpush.msra.mxu0 0.0
    %973 = vmatpush.msra.mxu0 0.0
    %974 = vmatpush.msra.mxu0 0.0
    %975 = vmatpush.msra.mxu0 0.0
    %976 = vmatpush.msra.mxu0 0.0
    %977 = vmatpush.msra.mxu0 0.0
    %978 = vmatpush.msra.mxu0 0.0
    %979 = vmatpush.msra.mxu0 0.0
    %980 = vmatpush.msra.mxu0 0.0
    %981 = vmatpush.msra.mxu0 0.0
    %982 = vmatpush.msra.mxu0 0.0
    %983 = vmatpush.msra.mxu0 0.0
    %984 = vmatpush.msra.mxu0 0.0
    %985 = vmatpush.msra.mxu0 %v571
    %986 = vmatmul.f32.gmra.mxu0 %v928
    %v987 = vpop.f32.mrf.mxu0
    %v988 = vadd.f32 0.0, %v987
    %989 = vdwg.mxu0
    %990 = vmatpush.msra.mxu0 0.0
    %991 = vmatpush.msra.mxu0 0.0
    %992 = vmatpush.msra.mxu0 0.0
    %993 = vmatpush.msra.mxu0 0.0
    %994 = vmatpush.msra.mxu0 0.0
    %995 = vmatpush.msra.mxu0 0.0
    %996 = vmatpush.msra.mxu0 0.0
    %997 = vmatpush.msra.mxu0 0.0
    %998 = vmatpush.msra.mxu0 0.0
    %999 = vmatpush.msra.mxu0 0.0
    %1000 = vmatpush.msra.mxu0 0.0
    %1001 = vmatpush.msra.mxu0 0.0
    %1002 = vmatpush.msra.mxu0 0.0
    %1003 = vmatpush.msra.mxu0 0.0
    %1004 = vmatpush.msra.mxu0 0.0
    %1005 = vmatpush.msra.mxu0 %v572
    %1006 = vmatmul.f32.gmra.mxu0 %v928
    %v1007 = vpop.f32.mrf.mxu0
    %v1008 = vadd.f32 0.0, %v1007
    %1009 = vdwg.mxu0
    %1010 = vmatpush.msra.mxu0 %v922
    %1011 = vmatpush.msra.mxu0 %v918
    %1012 = vmatpush.msra.mxu0 %v914
    %1013 = vmatpush.msra.mxu0 %v910
    %1014 = vmatpush.msra.mxu0 %v906
    %1015 = vmatpush.msra.mxu0 %v902
    %1016 = vmatpush.msra.mxu0 %v898
    %1017 = vmatpush.msra.mxu0 %v894
    %1018 = vmatpush.msra.mxu0 %v890
    %1019 = vmatpush.msra.mxu0 %v886
    %1020 = vmatpush.msra.mxu0 %v882
    %1021 = vmatpush.msra.mxu0 %v878
    %1022 = vmatpush.msra.mxu0 %v874
    %1023 = vmatpush.msra.mxu0 %v870
    %1024 = vmatpush.msra.mxu0 %v866
    %1025 = vmatpush.msra.mxu0 %v862
    %1026 = vmatmul.f32.gmra.mxu0 %v860
    %v1027 = vpop.f32.mrf.mxu0
    %v1028 = vadd.f32 %v948, %v1027
    %1029 = vdwg.mxu0
    %1030 = vmatpush.msra.mxu0 %v923
    %1031 = vmatpush.msra.mxu0 %v919
    %1032 = vmatpush.msra.mxu0 %v915
    %1033 = vmatpush.msra.mxu0 %v911
    %1034 = vmatpush.msra.mxu0 %v907
    %1035 = vmatpush.msra.mxu0 %v903
    %1036 = vmatpush.msra.mxu0 %v899
    %1037 = vmatpush.msra.mxu0 %v895
    %1038 = vmatpush.msra.mxu0 %v891
    %1039 = vmatpush.msra.mxu0 %v887
    %1040 = vmatpush.msra.mxu0 %v883
    %1041 = vmatpush.msra.mxu0 %v879
    %1042 = vmatpush.msra.mxu0 %v875
    %1043 = vmatpush.msra.mxu0 %v871
    %1044 = vmatpush.msra.mxu0 %v867
    %1045 = vmatpush.msra.mxu0 %v863
    %1046 = vmatmul.f32.gmra.mxu0 %v860
    %v1047 = vpop.f32.mrf.mxu0
    %v1048 = vadd.f32 %v968, %v1047
    %1049 = vdwg.mxu0
    %1050 = vmatpush.msra.mxu0 %v924
    %1051 = vmatpush.msra.mxu0 %v920
    %1052 = vmatpush.msra.mxu0 %v916
    %1053 = vmatpush.msra.mxu0 %v912
    %1054 = vmatpush.msra.mxu0 %v908
    %1055 = vmatpush.msra.mxu0 %v904
    %1056 = vmatpush.msra.mxu0 %v900
    %1057 = vmatpush.msra.mxu0 %v896
    %1058 = vmatpush.msra.mxu0 %v892
    %1059 = vmatpush.msra.mxu0 %v888
    %1060 = vmatpush.msra.mxu0 %v884
    %1061 = vmatpush.msra.mxu0 %v880
    %1062 = vmatpush.msra.mxu0 %v876
    %1063 = vmatpush.msra.mxu0 %v872
    %1064 = vmatpush.msra.mxu0 %v868
    %1065 = vmatpush.msra.mxu0 %v864
    %1066 = vmatmul.f32.gmra.mxu0 %v860
    %v1067 = vpop.f32.mrf.mxu0
    %v1068 = vadd.f32 %v988, %v1067
    %1069 = vdwg.mxu0
    %1070 = vmatpush.msra.mxu0 %v925
    %1071 = vmatpush.msra.mxu0 %v921
    %1072 = vmatpush.msra.mxu0 %v917
    %1073 = vmatpush.msra.mxu0 %v913
    %1074 = vmatpush.msra.mxu0 %v909
    %1075 = vmatpush.msra.mxu0 %v905
    %1076 = vmatpush.msra.mxu0 %v901
    %1077 = vmatpush.msra.mxu0 %v897
    %1078 = vmatpush.msra.mxu0 %v893
    %1079 = vmatpush.msra.mxu0 %v889
    %1080 = vmatpush.msra.mxu0 %v885
    %1081 = vmatpush.msra.mxu0 %v881
    %1082 = vmatpush.msra.mxu0 %v877
    %1083 = vmatpush.msra.mxu0 %v873
    %1084 = vmatpush.msra.mxu0 %v869
    %1085 = vmatpush.msra.mxu0 %v865
    %1086 = vmatmul.f32.gmra.mxu0 %v860
    %v1087 = vpop.f32.mrf.mxu0
    %v1088 = vadd.f32 %v1008, %v1087
    %1089 = vdwg.mxu0
    %1090 = vset.pattern.permute.xlu0 39
    %1091 = vperm.xlu0 %1090, %v55
    %v1092 = vpop.permute.xlu0 %1091
    %v1094 = vadd.f32 %v1028, %v1092
    %v1095 = vadd.f32 %v1048, %v1092
    %v1096 = vadd.f32 %v1068, %v1092
    %v1097 = vadd.f32 %v1088, %v1092
    %v1102 = vrot.slane %v1095, 4
    %v1103 = vrot.slane %v1097, 4
    %v1104 = vsel %vm75, %v1094, %v1102
    %v1105 = vsel %vm75, %v1096, %v1103
    %1108 = vst [vmem:[%s5] sm:$0xff] %v1104
    %1109 = vst [vmem:[%s5 + $0x8] sm:$0xff] %v1105
    // Predicated region
    $region30: #{my_ensemble_forward.1} parent=1 // pred_check
      _
    $region31: #{my_ensemble_forward.1} parent=1 // pred_check_branch
      %1111 = sbr.rel (0) target = $region33
    $region32: #{my_ensemble_forward.1} parent=1 // pred_region
      _
    $region33: #{my_ensemble_forward.1} parent=1 // pred_fallthru
      _
    // Predicated region
    $region34: #{my_ensemble_forward.1} parent=1 // pred_check
      _
    $region35: #{my_ensemble_forward.1} parent=1 // pred_check_branch
      %1113 = sbr.rel (0) target = $region37
    $region36: #{my_ensemble_forward.1} parent=1 // pred_region
      _
    $region37: #{my_ensemble_forward.1} parent=1 // pred_fallthru
      _
    %1114 = vsyncpa [#allocation4], 1
    %1115 = vsyncpa [#allocation6], 1

</llo_original>
